<compile_context>
chip_gen: v7x
topology: tpu7x:2x2x1
jax: 0.10.0
libtpu: 0.0.40
codegen_flags: <defaults>
</compile_context>

<pallas_src>
import jax
import jax.numpy as jnp
from jax.experimental import pallas as pl
from jax.experimental.pallas import tpu as pltpu


def _round_up(x, m):
    return ((x + m - 1) // m) * m


# ------------------------------ fused kernel -------------------------------

def _make_kernel(program_length, use_bf16):
    mxu_dtype = jnp.bfloat16 if use_bf16 else jnp.float32

    def mm(a, w_ref):
        # MXU matmul: bf16 operands, f32 accumulation.
        return jnp.dot(a.astype(mxu_dtype), w_ref[...],
                       preferred_element_type=jnp.float32)

    def body(x_ref, win_ref, bin_ref, prog_ref, wdn_ref, bdn_ref,
             wup_ref, bup_ref, wout_ref, bout_ref, o_ref):
        # in_embed: h = x @ W_in + b_in   (f32 accumulator, stays in VMEM/vregs)
        h = mm(x_ref[...], win_ref) + bin_ref[...]

        # program loop (statically unrolled; program_length is a Python int)
        if program_length > 0:
            prog = prog_ref[...]                      # (L, inst_width) f32
            for i in range(program_length):
                inst = prog[i:i + 1, :]               # (1, inst_width)
                reg = mm(h, wdn_ref) + bdn_ref[...]   # alu_down
                reg = reg * inst                      # scale by instruction
                # TODO(synk): training-mode Dropout(0.1) mask via
                # pltpu.prng_random_bits; identity in inference mode.
                h = h + (mm(reg, wup_ref) + bup_ref[...])  # residual alu_up

        # out_embed + log_softmax (lane-dense padded logits; padded bias is
        # -1e30 so padded columns contribute exactly 0 to the denominator).
        z = mm(h, wout_ref) + bout_ref[...]
        m = jnp.max(z, axis=-1, keepdims=True)
        lse = jnp.log(jnp.sum(jnp.exp(z - m), axis=-1, keepdims=True))
        o_ref[...] = (z - m - lse).astype(o_ref.dtype)

    if program_length > 0:
        return body

    def body_no_prog(x_ref, win_ref, bin_ref, wout_ref, bout_ref, o_ref):
        return body(x_ref, win_ref, bin_ref, None, None, None, None, None,
                    wout_ref, bout_ref, o_ref)

    return body_no_prog


# ------------------------------ wrapper -------------------------------------

def processor_net_forward(params, x, *, block_m=256, use_bf16=True):
    """Fused Pallas forward of ProcessorNet.  x: (N, ...) -> (N, out_size)."""
    N = x.shape[0]
    x2 = x.reshape(N, -1)                              # torch.flatten(x, 1)
    in_size = x2.shape[1]
    hidden = params["w_in"].shape[1]
    out_size = params["w_out"].shape[1]
    program_length = params["program"].shape[0]
    mxu_dtype = jnp.bfloat16 if use_bf16 else jnp.float32

    # ---- batch tiling (M grid axis) ----
    tm = min(_round_up(block_m, 8), _round_up(max(N, 8), 8))
    m_pad = _round_up(N, tm)
    xp = x2.astype(mxu_dtype)
    if m_pad != N:
        xp = jnp.pad(xp, ((0, m_pad - N), (0, 0)))

    # ---- weight prep (bf16 MXU operands, f32 biases) ----
    w_in = params["w_in"].astype(mxu_dtype)
    b_in = params["b_in"].reshape(1, hidden).astype(jnp.float32)

    out_pad = _round_up(out_size, 128)                 # lane-dense output
    w_out = jnp.pad(params["w_out"], ((0, 0), (0, out_pad - out_size)))
    w_out = w_out.astype(mxu_dtype)
    b_out = jnp.pad(params["b_out"].astype(jnp.float32),
                    (0, out_pad - out_size), constant_values=-1e30)
    b_out = b_out.reshape(1, out_pad)

    def full(a):                                       # whole array, VMEM-resident
        return pl.BlockSpec(a.shape, lambda i: (0, 0))

    inputs = [xp, w_in, b_in]
    in_specs = [pl.BlockSpec((tm, in_size), lambda i: (i, 0)),
                full(w_in), full(b_in)]

    if program_length > 0:
        prog = params["program"].astype(jnp.float32)
        w_dn = params["w_dn"].astype(mxu_dtype)
        b_dn = params["b_dn"].reshape(1, -1).astype(jnp.float32)
        w_up = params["w_up"].astype(mxu_dtype)
        b_up = params["b_up"].reshape(1, hidden).astype(jnp.float32)
        inputs += [prog, w_dn, b_dn, w_up, b_up]
        in_specs += [full(prog), full(w_dn), full(b_dn), full(w_up), full(b_up)]

    inputs += [w_out, b_out]
    in_specs += [full(w_out), full(b_out)]

    out = pl.pallas_call(
        _make_kernel(program_length, use_bf16),
        out_shape=jax.ShapeDtypeStruct((m_pad, out_pad), jnp.float32),
        grid_spec=pltpu.PrefetchScalarGridSpec(
            num_scalar_prefetch=0,
            grid=(m_pad // tm,),
            in_specs=in_specs,
            out_specs=pl.BlockSpec((tm, out_pad), lambda i: (i, 0)),
        ),
        compiler_params=pltpu.CompilerParams(
            dimension_semantics=("parallel",),
            vmem_limit_bytes=32 * 1024 * 1024,
        ),
    )(*inputs)
    return out[:N, :out_size]


# ------------------------------ reference -----------------------------------

def processor_net_ref(params, x, *, operand_dtype=jnp.float32):
    """Pure-JAX reference matching PyTorch semantics (eval mode)."""
    def mm(a, w):
        return jnp.dot(a.astype(operand_dtype), w.astype(operand_dtype),
                       preferred_element_type=jnp.float32)

    h = mm(x.reshape(x.shape[0], -1), params["w_in"]) + params["b_in"]
    for i in range(params["program"].shape[0]):
        inst = params["program"][i]
        reg = mm(h, params["w_dn"]) + params["b_dn"]
        reg = reg * inst
        # dropout: identity in eval mode
        h = h + (mm(reg, params["w_up"]) + params["b_up"])
    z = mm(h, params["w_out"]) + params["b_out"]
    return jax.nn.log_softmax(z, axis=-1)


# ------------------------------ parameters ----------------------------------

def init_params(key, program_length=4, inst_width=16, hidden_size=128,
                in_size=28 * 28, out_size=10):
    ks = jax.random.split(key, 9)

    def linear(kw, kb, fan_in, fan_out):
        bound = 1.0 / jnp.sqrt(jnp.float32(fan_in))
        w = jax.random.uniform(kw, (fan_in, fan_out), jnp.float32, -bound, bound)
        b = jax.random.uniform(kb, (fan_out,), jnp.float32, -bound, bound)
        return w, b

    scale = 1.0 / (0.1 + program_length * inst_width)
    p = {}
    p["program"] = jax.random.normal(
        ks[0], (program_length, inst_width), jnp.float32) * scale
    p["w_in"], p["b_in"] = linear(ks[1], ks[2], in_size, hidden_size)
    p["w_dn"], p["b_dn"] = linear(ks[3], ks[4], hidden_size, inst_width)
    p["w_up"], p["b_up"] = linear(ks[5], ks[6], inst_width, hidden_size)
    p["w_out"], p["b_out"] = linear(ks[7], ks[8], hidden_size, out_size)
    return p


# --------------------------------- main --------------------------------------

if __name__ == "__main__":
    key = jax.random.PRNGKey(0)
    pkey, xkey = jax.random.split(key)

    batch, out_size = 64, 10
    params = init_params(pkey, program_length=4, inst_width=16,
                         hidden_size=128, in_size=28 * 28, out_size=out_size)
    x = jax.random.normal(xkey, (batch, 1, 28, 28), jnp.float32)

    # block_m=32 -> grid of 2 batch tiles (exercises the tiled/pipelined path).
    out = jax.block_until_ready(processor_net_forward(params, x, block_m=32))
    assert out.shape == (batch, out_size), out.shape

    # Precision-matched reference (same bf16 operands / f32 accumulation).
    ref_bf16 = jax.block_until_ready(
        processor_net_ref(params, x, operand_dtype=jnp.bfloat16))
    assert jnp.allclose(out, ref_bf16, atol=2e-3, rtol=2e-3), (
        "mismatch vs bf16-matched reference")

    # Loose sanity check against full-f32 PyTorch-semantics reference.
    ref_f32 = jax.block_until_ready(
        processor_net_ref(params, x, operand_dtype=jnp.float32))
    assert jnp.allclose(out, ref_f32, atol=1e-1), "mismatch vs f32 reference"

    print("KERNEL_OK")
</pallas_src>

<mosaic_0001>
module attributes {stable_mosaic.version = 11 : i64} {
  func.func @body(%arg0: i32, %arg1: memref<32x784xbf16, #tpu.memory_space<vmem>>, %arg2: memref<784x128xbf16, #tpu.memory_space<vmem>>, %arg3: memref<1x128xf32, #tpu.memory_space<vmem>>, %arg4: memref<4x16xf32, #tpu.memory_space<vmem>>, %arg5: memref<128x16xbf16, #tpu.memory_space<vmem>>, %arg6: memref<1x16xf32, #tpu.memory_space<vmem>>, %arg7: memref<16x128xbf16, #tpu.memory_space<vmem>>, %arg8: memref<1x128xf32, #tpu.memory_space<vmem>>, %arg9: memref<128x128xbf16, #tpu.memory_space<vmem>>, %arg10: memref<1x128xf32, #tpu.memory_space<vmem>>, %arg11: memref<32x128xf32, #tpu.memory_space<vmem>>) attributes {dimension_semantics = [#tpu.dimension_semantics<parallel>], iteration_bounds = array<i64: 2>, scalar_prefetch = 0 : i64, scratch_operands = 0 : i64, tpu.core_type = #tpu.core_type<tc>, window_params = [{transform_indices = @transform_0, window_bounds = array<i64: 32, 784>}, {pipeline_mode = #tpu.pipeline_mode<synchronous>, transform_indices = @transform_1, window_bounds = array<i64: 784, 128>}, {pipeline_mode = #tpu.pipeline_mode<synchronous>, transform_indices = @transform_2, window_bounds = array<i64: 1, 128>}, {pipeline_mode = #tpu.pipeline_mode<synchronous>, transform_indices = @transform_3, window_bounds = array<i64: 4, 16>}, {pipeline_mode = #tpu.pipeline_mode<synchronous>, transform_indices = @transform_4, window_bounds = array<i64: 128, 16>}, {pipeline_mode = #tpu.pipeline_mode<synchronous>, transform_indices = @transform_5, window_bounds = array<i64: 1, 16>}, {pipeline_mode = #tpu.pipeline_mode<synchronous>, transform_indices = @transform_6, window_bounds = array<i64: 16, 128>}, {pipeline_mode = #tpu.pipeline_mode<synchronous>, transform_indices = @transform_7, window_bounds = array<i64: 1, 128>}, {pipeline_mode = #tpu.pipeline_mode<synchronous>, transform_indices = @transform_8, window_bounds = array<i64: 128, 128>}, {pipeline_mode = #tpu.pipeline_mode<synchronous>, transform_indices = @transform_9, window_bounds = array<i64: 1, 128>}, {transform_indices = @transform_10, window_bounds = array<i64: 32, 128>}]} {
    %c0 = arith.constant 0 : index
    %c0_0 = arith.constant 0 : index
    %0 = vector.load %arg1[%c0, %c0_0] : memref<32x784xbf16, #tpu.memory_space<vmem>>, vector<32x784xbf16>
    %c0_1 = arith.constant 0 : index
    %c0_2 = arith.constant 0 : index
    %1 = vector.load %arg2[%c0_1, %c0_2] : memref<784x128xbf16, #tpu.memory_space<vmem>>, vector<784x128xbf16>
    %cst = arith.constant dense<0.000000e+00> : vector<32x128xf32>
    %2 = tpu.matmul %0, %1, %cst {dimension_numbers = #tpu.dot_dimension_numbers<[1], [0], [0], [1], [0, 0, 1, 1], [], []>} : vector<32x784xbf16>, vector<784x128xbf16>, vector<32x128xf32> -> vector<32x128xf32>
    %c0_3 = arith.constant 0 : index
    %c0_4 = arith.constant 0 : index
    %3 = vector.load %arg3[%c0_3, %c0_4] : memref<1x128xf32, #tpu.memory_space<vmem>>, vector<1x128xf32>
    %4 = vector.broadcast %3 : vector<1x128xf32> to vector<32x128xf32>
    %5 = arith.addf %2, %4 : vector<32x128xf32>
    %c0_5 = arith.constant 0 : index
    %c0_6 = arith.constant 0 : index
    %6 = vector.load %arg4[%c0_5, %c0_6] : memref<4x16xf32, #tpu.memory_space<vmem>>, vector<4x16xf32>
    %7 = vector.extract_strided_slice %6 {offsets = [0, 0], sizes = [1, 16], strides = [1, 1]} : vector<4x16xf32> to vector<1x16xf32>
    %8 = arith.truncf %5 : vector<32x128xf32> to vector<32x128xbf16>
    %c0_7 = arith.constant 0 : index
    %c0_8 = arith.constant 0 : index
    %9 = vector.load %arg5[%c0_7, %c0_8] : memref<128x16xbf16, #tpu.memory_space<vmem>>, vector<128x16xbf16>
    %cst_9 = arith.constant dense<0.000000e+00> : vector<32x16xf32>
    %10 = tpu.matmul %8, %9, %cst_9 {dimension_numbers = #tpu.dot_dimension_numbers<[1], [0], [0], [1], [0, 0, 1, 1], [], []>} : vector<32x128xbf16>, vector<128x16xbf16>, vector<32x16xf32> -> vector<32x16xf32>
    %c0_10 = arith.constant 0 : index
    %c0_11 = arith.constant 0 : index
    %11 = vector.load %arg6[%c0_10, %c0_11] : memref<1x16xf32, #tpu.memory_space<vmem>>, vector<1x16xf32>
    %12 = vector.broadcast %11 : vector<1x16xf32> to vector<32x16xf32>
    %13 = arith.addf %10, %12 : vector<32x16xf32>
    %14 = vector.broadcast %7 : vector<1x16xf32> to vector<32x16xf32>
    %15 = arith.mulf %13, %14 : vector<32x16xf32>
    %16 = arith.truncf %15 : vector<32x16xf32> to vector<32x16xbf16>
    %c0_12 = arith.constant 0 : index
    %c0_13 = arith.constant 0 : index
    %17 = vector.load %arg7[%c0_12, %c0_13] : memref<16x128xbf16, #tpu.memory_space<vmem>>, vector<16x128xbf16>
    %cst_14 = arith.constant dense<0.000000e+00> : vector<32x128xf32>
    %18 = tpu.matmul %16, %17, %cst_14 {dimension_numbers = #tpu.dot_dimension_numbers<[1], [0], [0], [1], [0, 0, 1, 1], [], []>} : vector<32x16xbf16>, vector<16x128xbf16>, vector<32x128xf32> -> vector<32x128xf32>
    %c0_15 = arith.constant 0 : index
    %c0_16 = arith.constant 0 : index
    %19 = vector.load %arg8[%c0_15, %c0_16] : memref<1x128xf32, #tpu.memory_space<vmem>>, vector<1x128xf32>
    %20 = vector.broadcast %19 : vector<1x128xf32> to vector<32x128xf32>
    %21 = arith.addf %18, %20 : vector<32x128xf32>
    %22 = arith.addf %5, %21 : vector<32x128xf32>
    %23 = vector.extract_strided_slice %6 {offsets = [1, 0], sizes = [1, 16], strides = [1, 1]} : vector<4x16xf32> to vector<1x16xf32>
    %24 = arith.truncf %22 : vector<32x128xf32> to vector<32x128xbf16>
    %c0_17 = arith.constant 0 : index
    %c0_18 = arith.constant 0 : index
    %25 = vector.load %arg5[%c0_17, %c0_18] : memref<128x16xbf16, #tpu.memory_space<vmem>>, vector<128x16xbf16>
    %cst_19 = arith.constant dense<0.000000e+00> : vector<32x16xf32>
    %26 = tpu.matmul %24, %25, %cst_19 {dimension_numbers = #tpu.dot_dimension_numbers<[1], [0], [0], [1], [0, 0, 1, 1], [], []>} : vector<32x128xbf16>, vector<128x16xbf16>, vector<32x16xf32> -> vector<32x16xf32>
    %c0_20 = arith.constant 0 : index
    %c0_21 = arith.constant 0 : index
    %27 = vector.load %arg6[%c0_20, %c0_21] : memref<1x16xf32, #tpu.memory_space<vmem>>, vector<1x16xf32>
    %28 = vector.broadcast %27 : vector<1x16xf32> to vector<32x16xf32>
    %29 = arith.addf %26, %28 : vector<32x16xf32>
    %30 = vector.broadcast %23 : vector<1x16xf32> to vector<32x16xf32>
    %31 = arith.mulf %29, %30 : vector<32x16xf32>
    %32 = arith.truncf %31 : vector<32x16xf32> to vector<32x16xbf16>
    %c0_22 = arith.constant 0 : index
    %c0_23 = arith.constant 0 : index
    %33 = vector.load %arg7[%c0_22, %c0_23] : memref<16x128xbf16, #tpu.memory_space<vmem>>, vector<16x128xbf16>
    %cst_24 = arith.constant dense<0.000000e+00> : vector<32x128xf32>
    %34 = tpu.matmul %32, %33, %cst_24 {dimension_numbers = #tpu.dot_dimension_numbers<[1], [0], [0], [1], [0, 0, 1, 1], [], []>} : vector<32x16xbf16>, vector<16x128xbf16>, vector<32x128xf32> -> vector<32x128xf32>
    %c0_25 = arith.constant 0 : index
    %c0_26 = arith.constant 0 : index
    %35 = vector.load %arg8[%c0_25, %c0_26] : memref<1x128xf32, #tpu.memory_space<vmem>>, vector<1x128xf32>
    %36 = vector.broadcast %35 : vector<1x128xf32> to vector<32x128xf32>
    %37 = arith.addf %34, %36 : vector<32x128xf32>
    %38 = arith.addf %22, %37 : vector<32x128xf32>
    %39 = vector.extract_strided_slice %6 {offsets = [2, 0], sizes = [1, 16], strides = [1, 1]} : vector<4x16xf32> to vector<1x16xf32>
    %40 = arith.truncf %38 : vector<32x128xf32> to vector<32x128xbf16>
    %c0_27 = arith.constant 0 : index
    %c0_28 = arith.constant 0 : index
    %41 = vector.load %arg5[%c0_27, %c0_28] : memref<128x16xbf16, #tpu.memory_space<vmem>>, vector<128x16xbf16>
    %cst_29 = arith.constant dense<0.000000e+00> : vector<32x16xf32>
    %42 = tpu.matmul %40, %41, %cst_29 {dimension_numbers = #tpu.dot_dimension_numbers<[1], [0], [0], [1], [0, 0, 1, 1], [], []>} : vector<32x128xbf16>, vector<128x16xbf16>, vector<32x16xf32> -> vector<32x16xf32>
    %c0_30 = arith.constant 0 : index
    %c0_31 = arith.constant 0 : index
    %43 = vector.load %arg6[%c0_30, %c0_31] : memref<1x16xf32, #tpu.memory_space<vmem>>, vector<1x16xf32>
    %44 = vector.broadcast %43 : vector<1x16xf32> to vector<32x16xf32>
    %45 = arith.addf %42, %44 : vector<32x16xf32>
    %46 = vector.broadcast %39 : vector<1x16xf32> to vector<32x16xf32>
    %47 = arith.mulf %45, %46 : vector<32x16xf32>
    %48 = arith.truncf %47 : vector<32x16xf32> to vector<32x16xbf16>
    %c0_32 = arith.constant 0 : index
    %c0_33 = arith.constant 0 : index
    %49 = vector.load %arg7[%c0_32, %c0_33] : memref<16x128xbf16, #tpu.memory_space<vmem>>, vector<16x128xbf16>
    %cst_34 = arith.constant dense<0.000000e+00> : vector<32x128xf32>
    %50 = tpu.matmul %48, %49, %cst_34 {dimension_numbers = #tpu.dot_dimension_numbers<[1], [0], [0], [1], [0, 0, 1, 1], [], []>} : vector<32x16xbf16>, vector<16x128xbf16>, vector<32x128xf32> -> vector<32x128xf32>
    %c0_35 = arith.constant 0 : index
    %c0_36 = arith.constant 0 : index
    %51 = vector.load %arg8[%c0_35, %c0_36] : memref<1x128xf32, #tpu.memory_space<vmem>>, vector<1x128xf32>
    %52 = vector.broadcast %51 : vector<1x128xf32> to vector<32x128xf32>
    %53 = arith.addf %50, %52 : vector<32x128xf32>
    %54 = arith.addf %38, %53 : vector<32x128xf32>
    %55 = vector.extract_strided_slice %6 {offsets = [3, 0], sizes = [1, 16], strides = [1, 1]} : vector<4x16xf32> to vector<1x16xf32>
    %56 = arith.truncf %54 : vector<32x128xf32> to vector<32x128xbf16>
    %c0_37 = arith.constant 0 : index
    %c0_38 = arith.constant 0 : index
    %57 = vector.load %arg5[%c0_37, %c0_38] : memref<128x16xbf16, #tpu.memory_space<vmem>>, vector<128x16xbf16>
    %cst_39 = arith.constant dense<0.000000e+00> : vector<32x16xf32>
    %58 = tpu.matmul %56, %57, %cst_39 {dimension_numbers = #tpu.dot_dimension_numbers<[1], [0], [0], [1], [0, 0, 1, 1], [], []>} : vector<32x128xbf16>, vector<128x16xbf16>, vector<32x16xf32> -> vector<32x16xf32>
    %c0_40 = arith.constant 0 : index
    %c0_41 = arith.constant 0 : index
    %59 = vector.load %arg6[%c0_40, %c0_41] : memref<1x16xf32, #tpu.memory_space<vmem>>, vector<1x16xf32>
    %60 = vector.broadcast %59 : vector<1x16xf32> to vector<32x16xf32>
    %61 = arith.addf %58, %60 : vector<32x16xf32>
    %62 = vector.broadcast %55 : vector<1x16xf32> to vector<32x16xf32>
    %63 = arith.mulf %61, %62 : vector<32x16xf32>
    %64 = arith.truncf %63 : vector<32x16xf32> to vector<32x16xbf16>
    %c0_42 = arith.constant 0 : index
    %c0_43 = arith.constant 0 : index
    %65 = vector.load %arg7[%c0_42, %c0_43] : memref<16x128xbf16, #tpu.memory_space<vmem>>, vector<16x128xbf16>
    %cst_44 = arith.constant dense<0.000000e+00> : vector<32x128xf32>
    %66 = tpu.matmul %64, %65, %cst_44 {dimension_numbers = #tpu.dot_dimension_numbers<[1], [0], [0], [1], [0, 0, 1, 1], [], []>} : vector<32x16xbf16>, vector<16x128xbf16>, vector<32x128xf32> -> vector<32x128xf32>
    %c0_45 = arith.constant 0 : index
    %c0_46 = arith.constant 0 : index
    %67 = vector.load %arg8[%c0_45, %c0_46] : memref<1x128xf32, #tpu.memory_space<vmem>>, vector<1x128xf32>
    %68 = vector.broadcast %67 : vector<1x128xf32> to vector<32x128xf32>
    %69 = arith.addf %66, %68 : vector<32x128xf32>
    %70 = arith.addf %54, %69 : vector<32x128xf32>
    %71 = arith.truncf %70 : vector<32x128xf32> to vector<32x128xbf16>
    %c0_47 = arith.constant 0 : index
    %c0_48 = arith.constant 0 : index
    %72 = vector.load %arg9[%c0_47, %c0_48] : memref<128x128xbf16, #tpu.memory_space<vmem>>, vector<128x128xbf16>
    %cst_49 = arith.constant dense<0.000000e+00> : vector<32x128xf32>
    %73 = tpu.matmul %71, %72, %cst_49 {dimension_numbers = #tpu.dot_dimension_numbers<[1], [0], [0], [1], [0, 0, 1, 1], [], []>} : vector<32x128xbf16>, vector<128x128xbf16>, vector<32x128xf32> -> vector<32x128xf32>
    %c0_50 = arith.constant 0 : index
    %c0_51 = arith.constant 0 : index
    %74 = vector.load %arg10[%c0_50, %c0_51] : memref<1x128xf32, #tpu.memory_space<vmem>>, vector<1x128xf32>
    %75 = vector.broadcast %74 : vector<1x128xf32> to vector<32x128xf32>
    %76 = arith.addf %73, %75 : vector<32x128xf32>
    %cst_52 = arith.constant dense<0xFF800000> : vector<32xf32>
    %77 = vector.multi_reduction <maximumf>, %76, %cst_52 [1] : vector<32x128xf32> to vector<32xf32>
    %78 = vector.shape_cast %77 : vector<32xf32> to vector<32x1xf32>
    %79 = vector.broadcast %78 : vector<32x1xf32> to vector<32x128xf32>
    %80 = arith.subf %76, %79 : vector<32x128xf32>
    %81 = math.exp %80 : vector<32x128xf32>
    %cst_53 = arith.constant dense<0.000000e+00> : vector<32xf32>
    %82 = vector.multi_reduction <add>, %81, %cst_53 [1] : vector<32x128xf32> to vector<32xf32>
    %83 = vector.shape_cast %82 : vector<32xf32> to vector<32x1xf32>
    %84 = math.log %83 : vector<32x1xf32>
    %85 = vector.broadcast %78 : vector<32x1xf32> to vector<32x128xf32>
    %86 = arith.subf %76, %85 : vector<32x128xf32>
    %87 = vector.broadcast %84 : vector<32x1xf32> to vector<32x128xf32>
    %88 = arith.subf %86, %87 : vector<32x128xf32>
    %c0_54 = arith.constant 0 : index
    %c0_55 = arith.constant 0 : index
    %89 = vector.load %arg11[%c0_54, %c0_55] : memref<32x128xf32, #tpu.memory_space<vmem>>, vector<32x128xf32>
    tpu.vector_store %arg11[%c0_54, %c0_55], %88 {strides = array<i32>} : memref<32x128xf32, #tpu.memory_space<vmem>>, vector<32x128xf32>,
    return
  }
  func.func @transform_0(%arg0: i32) -> (i32, i32) {
    %c0_i32 = arith.constant 0 : i32
    %c0_i32_0 = arith.constant 0 : i32
    return %arg0, %c0_i32 : i32, i32
  }
  func.func @transform_1(%arg0: i32) -> (i32, i32) {
    %c0_i32 = arith.constant 0 : i32
    %c0_i32_0 = arith.constant 0 : i32
    %c0_i32_1 = arith.constant 0 : i32
    return %c0_i32, %c0_i32_0 : i32, i32
  }
  func.func @transform_2(%arg0: i32) -> (i32, i32) {
    %c0_i32 = arith.constant 0 : i32
    %c0_i32_0 = arith.constant 0 : i32
    %c0_i32_1 = arith.constant 0 : i32
    return %c0_i32, %c0_i32_0 : i32, i32
  }
  func.func @transform_3(%arg0: i32) -> (i32, i32) {
    %c0_i32 = arith.constant 0 : i32
    %c0_i32_0 = arith.constant 0 : i32
    %c0_i32_1 = arith.constant 0 : i32
    return %c0_i32, %c0_i32_0 : i32, i32
  }
  func.func @transform_4(%arg0: i32) -> (i32, i32) {
    %c0_i32 = arith.constant 0 : i32
    %c0_i32_0 = arith.constant 0 : i32
    %c0_i32_1 = arith.constant 0 : i32
    return %c0_i32, %c0_i32_0 : i32, i32
  }
  func.func @transform_5(%arg0: i32) -> (i32, i32) {
    %c0_i32 = arith.constant 0 : i32
    %c0_i32_0 = arith.constant 0 : i32
    %c0_i32_1 = arith.constant 0 : i32
    return %c0_i32, %c0_i32_0 : i32, i32
  }
  func.func @transform_6(%arg0: i32) -> (i32, i32) {
    %c0_i32 = arith.constant 0 : i32
    %c0_i32_0 = arith.constant 0 : i32
    %c0_i32_1 = arith.constant 0 : i32
    return %c0_i32, %c0_i32_0 : i32, i32
  }
  func.func @transform_7(%arg0: i32) -> (i32, i32) {
    %c0_i32 = arith.constant 0 : i32
    %c0_i32_0 = arith.constant 0 : i32
    %c0_i32_1 = arith.constant 0 : i32
    return %c0_i32, %c0_i32_0 : i32, i32
  }
  func.func @transform_8(%arg0: i32) -> (i32, i32) {
    %c0_i32 = arith.constant 0 : i32
    %c0_i32_0 = arith.constant 0 : i32
    %c0_i32_1 = arith.constant 0 : i32
    return %c0_i32, %c0_i32_0 : i32, i32
  }
  func.func @transform_9(%arg0: i32) -> (i32, i32) {
    %c0_i32 = arith.constant 0 : i32
    %c0_i32_0 = arith.constant 0 : i32
    %c0_i32_1 = arith.constant 0 : i32
    return %c0_i32, %c0_i32_0 : i32, i32
  }
  func.func @transform_10(%arg0: i32) -> (i32, i32) {
    %c0_i32 = arith.constant 0 : i32
    %c0_i32_0 = arith.constant 0 : i32
    return %arg0, %c0_i32 : i32, i32
  }
}

</mosaic_0001>

<llo_original>
// kernel: tpu_custom_call.1
$region0: #{tpu_custom_call.1}
  #allocation0 [shape = 'u32[]', space=smem, size = 0x4, offset = 0x4, fixed_abs, tag = 'smem constant byte address 0x4 - core index']
  #allocation1 [shape = 'u32[144,128]{1,0:T(1,128)}', space=vmem, size = 0x12000, scoped, tag = 'internal scratch']
  %s0 = inlined_call_operand.hbm [shape: bf16[64,784], index: 0, kind: input, shape index: {}]
  %s1 = inlined_call_operand.hbm [shape: bf16[784,128], index: 1, kind: input, shape index: {}]
  %s2 = inlined_call_operand.vmem [shape: f32[1,128], index: 2, kind: input, shape index: {}]
  %s3 = inlined_call_operand.vmem [shape: f32[4,16], index: 3, kind: input, shape index: {}]
  %s4 = inlined_call_operand.vmem [shape: bf16[128,16], index: 4, kind: input, shape index: {}]
  %s5 = inlined_call_operand.vmem [shape: f32[1,16], index: 5, kind: input, shape index: {}]
  %s6 = inlined_call_operand.vmem [shape: bf16[16,128], index: 6, kind: input, shape index: {}]
  %s7 = inlined_call_operand.vmem [shape: f32[1,128], index: 7, kind: input, shape index: {}]
  %s8 = inlined_call_operand.vmem [shape: bf16[128,128], index: 8, kind: input, shape index: {}]
  %s9 = inlined_call_operand.vmem [shape: f32[1,128], index: 9, kind: input, shape index: {}]
  %s10 = inlined_call_operand.hbm [shape: f32[64,128], index: 10, kind: output, shape index: {}]
  %s11 = sld [smem:[#allocation0]]
  $region81: #{tpu_custom_call.1} parent=0
    _
  %s13 = ssub.s32 1, %s11
  %s14 = scalar_select 0, %s13, %s11
  $region1: #{tpu_custom_call.1} parent=0
    #allocation2 [shape = 'u8[114688]{0}', space=vmem, size = 0x1c000, scoped, tag = 'input window, operand 0']
    #allocation3 [shape = 's32[2]{0}', space=sflag, size = 0x8, scoped, tag = 'scoped memory for tpu_custom_call.1']
    #allocation4 [shape = 's32[2]{0}', space=sflag, size = 0x8, scoped, tag = 'scoped memory for tpu_custom_call.1']
    #allocation5 [shape = 'u8[200704]{0}', space=vmem, size = 0x31000, scoped, tag = 'input window, operand 1, single buffered']
    #allocation6 [shape = 's32[1]{0}', space=sflag, size = 0x4, scoped, tag = 'scoped memory for tpu_custom_call.1']
    #allocation7 [shape = 'u8[32768]{0}', space=vmem, size = 0x8000, scoped, tag = 'output window, operand 0']
    %15 = vsyncpa [#allocation3], 0
    %s16 = scalar_lea.sflag [#allocation3], 1
    %17 = vsyncpa %s16, 0
    %18 = vsyncpa [#allocation6], 0
    %19 = vsyncpa [#allocation4], 0
    %s20 = scalar_lea.sflag [#allocation4], 1
    %21 = vsyncpa %s20, 0
    loop: start=0, step=1, limit=4
    $region2: #{tpu_custom_call.1} parent=1 // loop_pre_header
      _
    $region3: #{tpu_custom_call.1} parent=1 // loop_header
      %s23 = sphi 0, %s27
      %p24 = scmp.ge.s32.totalorder %s23, 4
      %s33 = sphi 0, %s35
      %s36 = sphi 0, %s33
      %s37 = sphi 0, %s36
      %s53 = sphi 0, %s37
      %s57 = sphi 0, %s57
      %s59 = sphi 0, %s57
      %s60 = sphi 0, %s59
      %s74 = sphi 0, %s60
      %s78 = sphi 0, %s78
      %s80 = sphi 0, %s78
      %s81 = sphi 0, %s80
      %s95 = sphi 0, %s81
      %s99 = sphi 0, %s99
      %s101 = sphi 0, %s99
      %s102 = sphi 0, %s101
      %s116 = sphi 0, %s102
      %s120 = sphi 0, %s120
      %s122 = sphi 0, %s120
      %s123 = sphi 0, %s122
      %s137 = sphi 0, %s123
      %s141 = sphi 0, %s141
      %s143 = sphi 0, %s141
      %s144 = sphi 0, %s143
      %s158 = sphi 0, %s144
      %s162 = sphi 0, %s162
      %s164 = sphi 0, %s162
      %s165 = sphi 0, %s164
      %s179 = sphi 0, %s165
      %s183 = sphi 0, %s183
      %s185 = sphi 0, %s183
      %s186 = sphi 0, %s185
      %s200 = sphi 0, %s186
      %s204 = sphi 0, %s204
      %s206 = sphi 0, %s204
      %s207 = sphi 0, %s206
      %s221 = sphi 0, %s207
      %s225 = sphi 0, %s225
      %s227 = sphi 0, %s225
      %s228 = sphi 0, %s227
      %s242 = sphi 0, %s228
      %s248 = sphi 0, %s250
      %s251 = sphi 0, %s248
      %s252 = sphi 0, %s251
      %s268 = sphi 0, %s252
    $region4: #{tpu_custom_call.1} parent=1 // loop_header_branch
      %26 = sbr.rel (%p24) target = $region8
    $region5: #{tpu_custom_call.1} parent=1 // loop_body
      %s28 = ssub.s32 %s23, 1
      %s29 = ssub.s32 %s23, 2
      %s30 = sadd.s32 %s23, 1
      %s31 = ssub.s32 %s23, %s30
      %p32 = scmp.eq.s32.totalorder %s31, 0
      %s34 = sadd.s32 %s33, 1
      %s35 = scalar_select %p32, %s33, %s34
      %p38 = pneg %p32
      %p39 = scmp.eq.s32.totalorder %s23, 1
      %p40 = por %p38, %p39
      %p41 = scmp.ne.s32.totalorder %s33, %s36
      %p42 = scmp.eq.s32.totalorder %s23, 0
      %p43 = por %p41, %p42
      %p44 = scmp.ne.s32.totalorder %s33, %s36
      %p45 = scmp.eq.s32.totalorder %s28, 1
      %p46 = por %p44, %p45
      %p47 = scmp.ne.s32.totalorder %s36, %s37
      %p48 = scmp.eq.s32.totalorder %s28, 0
      %p49 = por %p47, %p48
      %p50 = scmp.ne.s32.totalorder %s36, %s37
      %p51 = scmp.eq.s32.totalorder %s29, 1
      %p52 = por %p50, %p51
      %p54 = scmp.ne.s32.totalorder %s37, %s53
      %p55 = scmp.eq.s32.totalorder %s29, 0
      %p56 = por %p54, %p55
      %s58 = sadd.s32 %s57, 1
      %p61 = scmp.eq.s32.totalorder %s23, 1
      %p62 = scmp.ne.s32.totalorder %s57, %s59
      %p63 = scmp.eq.s32.totalorder %s23, 0
      %p64 = por %p62, %p63
      %p65 = scmp.ne.s32.totalorder %s57, %s59
      %p66 = scmp.eq.s32.totalorder %s28, 1
      %p67 = por %p65, %p66
      %p68 = scmp.ne.s32.totalorder %s59, %s60
      %p69 = scmp.eq.s32.totalorder %s28, 0
      %p70 = por %p68, %p69
      %p71 = scmp.ne.s32.totalorder %s59, %s60
      %p72 = scmp.eq.s32.totalorder %s29, 1
      %p73 = por %p71, %p72
      %p75 = scmp.ne.s32.totalorder %s60, %s74
      %p76 = scmp.eq.s32.totalorder %s29, 0
      %p77 = por %p75, %p76
      %s79 = sadd.s32 %s78, 1
      %p82 = scmp.eq.s32.totalorder %s23, 1
      %p83 = scmp.ne.s32.totalorder %s78, %s80
      %p84 = scmp.eq.s32.totalorder %s23, 0
      %p85 = por %p83, %p84
      %p86 = scmp.ne.s32.totalorder %s78, %s80
      %p87 = scmp.eq.s32.totalorder %s28, 1
      %p88 = por %p86, %p87
      %p89 = scmp.ne.s32.totalorder %s80, %s81
      %p90 = scmp.eq.s32.totalorder %s28, 0
      %p91 = por %p89, %p90
      %p92 = scmp.ne.s32.totalorder %s80, %s81
      %p93 = scmp.eq.s32.totalorder %s29, 1
      %p94 = por %p92, %p93
      %p96 = scmp.ne.s32.totalorder %s81, %s95
      %p97 = scmp.eq.s32.totalorder %s29, 0
      %p98 = por %p96, %p97
      %s100 = sadd.s32 %s99, 1
      %p103 = scmp.eq.s32.totalorder %s23, 1
      %p104 = scmp.ne.s32.totalorder %s99, %s101
      %p105 = scmp.eq.s32.totalorder %s23, 0
      %p106 = por %p104, %p105
      %p107 = scmp.ne.s32.totalorder %s99, %s101
      %p108 = scmp.eq.s32.totalorder %s28, 1
      %p109 = por %p107, %p108
      %p110 = scmp.ne.s32.totalorder %s101, %s102
      %p111 = scmp.eq.s32.totalorder %s28, 0
      %p112 = por %p110, %p111
      %p113 = scmp.ne.s32.totalorder %s101, %s102
      %p114 = scmp.eq.s32.totalorder %s29, 1
      %p115 = por %p113, %p114
      %p117 = scmp.ne.s32.totalorder %s102, %s116
      %p118 = scmp.eq.s32.totalorder %s29, 0
      %p119 = por %p117, %p118
      %s121 = sadd.s32 %s120, 1
      %p124 = scmp.eq.s32.totalorder %s23, 1
      %p125 = scmp.ne.s32.totalorder %s120, %s122
      %p126 = scmp.eq.s32.totalorder %s23, 0
      %p127 = por %p125, %p126
      %p128 = scmp.ne.s32.totalorder %s120, %s122
      %p129 = scmp.eq.s32.totalorder %s28, 1
      %p130 = por %p128, %p129
      %p131 = scmp.ne.s32.totalorder %s122, %s123
      %p132 = scmp.eq.s32.totalorder %s28, 0
      %p133 = por %p131, %p132
      %p134 = scmp.ne.s32.totalorder %s122, %s123
      %p135 = scmp.eq.s32.totalorder %s29, 1
      %p136 = por %p134, %p135
      %p138 = scmp.ne.s32.totalorder %s123, %s137
      %p139 = scmp.eq.s32.totalorder %s29, 0
      %p140 = por %p138, %p139
      %s142 = sadd.s32 %s141, 1
      %p145 = scmp.eq.s32.totalorder %s23, 1
      %p146 = scmp.ne.s32.totalorder %s141, %s143
      %p147 = scmp.eq.s32.totalorder %s23, 0
      %p148 = por %p146, %p147
      %p149 = scmp.ne.s32.totalorder %s141, %s143
      %p150 = scmp.eq.s32.totalorder %s28, 1
      %p151 = por %p149, %p150
      %p152 = scmp.ne.s32.totalorder %s143, %s144
      %p153 = scmp.eq.s32.totalorder %s28, 0
      %p154 = por %p152, %p153
      %p155 = scmp.ne.s32.totalorder %s143, %s144
      %p156 = scmp.eq.s32.totalorder %s29, 1
      %p157 = por %p155, %p156
      %p159 = scmp.ne.s32.totalorder %s144, %s158
      %p160 = scmp.eq.s32.totalorder %s29, 0
      %p161 = por %p159, %p160
      %s163 = sadd.s32 %s162, 1
      %p166 = scmp.eq.s32.totalorder %s23, 1
      %p167 = scmp.ne.s32.totalorder %s162, %s164
      %p168 = scmp.eq.s32.totalorder %s23, 0
      %p169 = por %p167, %p168
      %p170 = scmp.ne.s32.totalorder %s162, %s164
      %p171 = scmp.eq.s32.totalorder %s28, 1
      %p172 = por %p170, %p171
      %p173 = scmp.ne.s32.totalorder %s164, %s165
      %p174 = scmp.eq.s32.totalorder %s28, 0
      %p175 = por %p173, %p174
      %p176 = scmp.ne.s32.totalorder %s164, %s165
      %p177 = scmp.eq.s32.totalorder %s29, 1
      %p178 = por %p176, %p177
      %p180 = scmp.ne.s32.totalorder %s165, %s179
      %p181 = scmp.eq.s32.totalorder %s29, 0
      %p182 = por %p180, %p181
      %s184 = sadd.s32 %s183, 1
      %p187 = scmp.eq.s32.totalorder %s23, 1
      %p188 = scmp.ne.s32.totalorder %s183, %s185
      %p189 = scmp.eq.s32.totalorder %s23, 0
      %p190 = por %p188, %p189
      %p191 = scmp.ne.s32.totalorder %s183, %s185
      %p192 = scmp.eq.s32.totalorder %s28, 1
      %p193 = por %p191, %p192
      %p194 = scmp.ne.s32.totalorder %s185, %s186
      %p195 = scmp.eq.s32.totalorder %s28, 0
      %p196 = por %p194, %p195
      %p197 = scmp.ne.s32.totalorder %s185, %s186
      %p198 = scmp.eq.s32.totalorder %s29, 1
      %p199 = por %p197, %p198
      %p201 = scmp.ne.s32.totalorder %s186, %s200
      %p202 = scmp.eq.s32.totalorder %s29, 0
      %p203 = por %p201, %p202
      %s205 = sadd.s32 %s204, 1
      %p208 = scmp.eq.s32.totalorder %s23, 1
      %p209 = scmp.ne.s32.totalorder %s204, %s206
      %p210 = scmp.eq.s32.totalorder %s23, 0
      %p211 = por %p209, %p210
      %p212 = scmp.ne.s32.totalorder %s204, %s206
      %p213 = scmp.eq.s32.totalorder %s28, 1
      %p214 = por %p212, %p213
      %p215 = scmp.ne.s32.totalorder %s206, %s207
      %p216 = scmp.eq.s32.totalorder %s28, 0
      %p217 = por %p215, %p216
      %p218 = scmp.ne.s32.totalorder %s206, %s207
      %p219 = scmp.eq.s32.totalorder %s29, 1
      %p220 = por %p218, %p219
      %p222 = scmp.ne.s32.totalorder %s207, %s221
      %p223 = scmp.eq.s32.totalorder %s29, 0
      %p224 = por %p222, %p223
      %s226 = sadd.s32 %s225, 1
      %p229 = scmp.eq.s32.totalorder %s23, 1
      %p230 = scmp.ne.s32.totalorder %s225, %s227
      %p231 = scmp.eq.s32.totalorder %s23, 0
      %p232 = por %p230, %p231
      %p233 = scmp.ne.s32.totalorder %s225, %s227
      %p234 = scmp.eq.s32.totalorder %s28, 1
      %p235 = por %p233, %p234
      %p236 = scmp.ne.s32.totalorder %s227, %s228
      %p237 = scmp.eq.s32.totalorder %s28, 0
      %p238 = por %p236, %p237
      %p239 = scmp.ne.s32.totalorder %s227, %s228
      %p240 = scmp.eq.s32.totalorder %s29, 1
      %p241 = por %p239, %p240
      %p243 = scmp.ne.s32.totalorder %s228, %s242
      %p244 = scmp.eq.s32.totalorder %s29, 0
      %p245 = por %p243, %p244
      %s246 = ssub.s32 %s23, %s30
      %p247 = scmp.eq.s32.totalorder %s246, 0
      %s249 = sadd.s32 %s248, 1
      %s250 = scalar_select %p247, %s248, %s249
      %p253 = pneg %p247
      %p254 = scmp.eq.s32.totalorder %s23, 1
      %p255 = por %p253, %p254
      %p256 = scmp.ne.s32.totalorder %s248, %s251
      %p257 = scmp.eq.s32.totalorder %s23, 0
      %p258 = por %p256, %p257
      %p259 = scmp.ne.s32.totalorder %s248, %s251
      %p260 = scmp.eq.s32.totalorder %s28, 1
      %p261 = por %p259, %p260
      %p262 = scmp.ne.s32.totalorder %s251, %s252
      %p263 = scmp.eq.s32.totalorder %s28, 0
      %p264 = por %p262, %p263
      %p265 = scmp.ne.s32.totalorder %s251, %s252
      %p266 = scmp.eq.s32.totalorder %s29, 1
      %p267 = por %p265, %p266
      %p269 = scmp.ne.s32.totalorder %s252, %s268
      %p270 = scmp.eq.s32.totalorder %s29, 0
      %p271 = por %p269, %p270
      %p272 = scmp.le.s32.totalorder 1, %s23
      %p273 = scmp.lt.s32.totalorder %s23, 3
      %p274 = pnand %p272, %p273
      %p275 = pneg %p274
      // Predicated region
      $region9: #{tpu_custom_call.1} parent=5 // pred_check
        _
      $region10: #{tpu_custom_call.1} parent=5 // pred_check_branch
        %277 = sbr.rel (%p274) target = $region12
      $region11: #{tpu_custom_call.1} parent=5 // pred_region
        %s278 = ssub.s32 %s23, 1
        // Predicated region
        $region13: #{tpu_custom_call.1} parent=11 // pred_check
          %p279 = pneg %p70
        $region14: #{tpu_custom_call.1} parent=11 // pred_check_branch
          %281 = sbr.rel (%p279) target = $region16
        $region15: #{tpu_custom_call.1} parent=11 // pred_region
          %s283 = ssub.s32 6272, 6272
          %284 = vsyncadd [#allocation6], %s283
          %s285 = sshll.u32 [#allocation5], 4
          %s286 = int_to_ptr.vmem [resolvable:$true] %s285
          %291 = dma.hbm_to_vmem [thread:$0]  %s1, 6272, %s286, [#allocation6], 64, 64, 4
        $region16: #{tpu_custom_call.1} parent=11 // pred_fallthru
          _
        // Predicated region
        $region17: #{tpu_custom_call.1} parent=11 // pred_check
          %p292 = pneg %p91
        $region18: #{tpu_custom_call.1} parent=11 // pred_check_branch
          %294 = sbr.rel (%p292) target = $region20
        $region19: #{tpu_custom_call.1} parent=11 // pred_region
          _
        $region20: #{tpu_custom_call.1} parent=11 // pred_fallthru
          _
        // Predicated region
        $region21: #{tpu_custom_call.1} parent=11 // pred_check
          %p295 = pneg %p112
        $region22: #{tpu_custom_call.1} parent=11 // pred_check_branch
          %297 = sbr.rel (%p295) target = $region24
        $region23: #{tpu_custom_call.1} parent=11 // pred_region
          _
        $region24: #{tpu_custom_call.1} parent=11 // pred_fallthru
          _
        // Predicated region
        $region25: #{tpu_custom_call.1} parent=11 // pred_check
          %p298 = pneg %p133
        $region26: #{tpu_custom_call.1} parent=11 // pred_check_branch
          %300 = sbr.rel (%p298) target = $region28
        $region27: #{tpu_custom_call.1} parent=11 // pred_region
          _
        $region28: #{tpu_custom_call.1} parent=11 // pred_fallthru
          _
        // Predicated region
        $region29: #{tpu_custom_call.1} parent=11 // pred_check
          %p301 = pneg %p154
        $region30: #{tpu_custom_call.1} parent=11 // pred_check_branch
          %303 = sbr.rel (%p301) target = $region32
        $region31: #{tpu_custom_call.1} parent=11 // pred_region
          _
        $region32: #{tpu_custom_call.1} parent=11 // pred_fallthru
          _
        // Predicated region
        $region33: #{tpu_custom_call.1} parent=11 // pred_check
          %p304 = pneg %p175
        $region34: #{tpu_custom_call.1} parent=11 // pred_check_branch
          %306 = sbr.rel (%p304) target = $region36
        $region35: #{tpu_custom_call.1} parent=11 // pred_region
          _
        $region36: #{tpu_custom_call.1} parent=11 // pred_fallthru
          _
        // Predicated region
        $region37: #{tpu_custom_call.1} parent=11 // pred_check
          %p307 = pneg %p196
        $region38: #{tpu_custom_call.1} parent=11 // pred_check_branch
          %309 = sbr.rel (%p307) target = $region40
        $region39: #{tpu_custom_call.1} parent=11 // pred_region
          _
        $region40: #{tpu_custom_call.1} parent=11 // pred_fallthru
          _
        // Predicated region
        $region41: #{tpu_custom_call.1} parent=11 // pred_check
          %p310 = pneg %p217
        $region42: #{tpu_custom_call.1} parent=11 // pred_check_branch
          %312 = sbr.rel (%p310) target = $region44
        $region43: #{tpu_custom_call.1} parent=11 // pred_region
          _
        $region44: #{tpu_custom_call.1} parent=11 // pred_fallthru
          _
        // Predicated region
        $region45: #{tpu_custom_call.1} parent=11 // pred_check
          %p313 = pneg %p238
        $region46: #{tpu_custom_call.1} parent=11 // pred_check_branch
          %315 = sbr.rel (%p313) target = $region48
        $region47: #{tpu_custom_call.1} parent=11 // pred_region
          _
        $region48: #{tpu_custom_call.1} parent=11 // pred_fallthru
          _
      $region12: #{tpu_custom_call.1} parent=5 // pred_fallthru
        _
      %p316 = scmp.lt.s32.totalorder %s23, 2
      // Predicated region
      $region49: #{tpu_custom_call.1} parent=5 // pred_check
        %p317 = pneg %p316
      $region50: #{tpu_custom_call.1} parent=5 // pred_check_branch
        %319 = sbr.rel (%p317) target = $region52
      $region51: #{tpu_custom_call.1} parent=5 // pred_region
        // Predicated region
        $region53: #{tpu_custom_call.1} parent=51 // pred_check
          %p320 = pneg %p43
        $region54: #{tpu_custom_call.1} parent=51 // pred_check_branch
          %322 = sbr.rel (%p320) target = $region56
        $region55: #{tpu_custom_call.1} parent=51 // pred_region
          %s323 = sand.u32 %s33, 1
          %s324 = scalar_lea.sflag [#allocation3], %s323
          %s325 = sand.u32 %s33, 1
          %s326 = smul.addr %s325, 112
          %s327 = scalar_lea.vmem [#allocation2], %s326
          %s328 = smul.u32 4, %s23
          %s330 = ssub.s32 1792, 1792
          %331 = vsyncadd %s324, %s330
          %s332 = smul.addr %s328, 7
          %s333 = smul.addr %s332, 64
          %s334 = scalar_lea.hbm %s0, %s333
          %s335 = sshll.u32 %s327, 4
          %s336 = int_to_ptr.vmem [resolvable:$true] %s335
          %341 = dma.hbm_to_vmem [thread:$0]  %s334, 1792, %s336, %s324, 448, 448, 28
        $region56: #{tpu_custom_call.1} parent=51 // pred_fallthru
          _
      $region52: #{tpu_custom_call.1} parent=5 // pred_fallthru
        _
      %p342 = scmp.le.s32.totalorder 1, %s23
      %p343 = scmp.lt.s32.totalorder %s23, 3
      %p344 = pnand %p342, %p343
      %p345 = pneg %p344
      // Predicated region
      $region57: #{tpu_custom_call.1} parent=5 // pred_check
        _
      $region58: #{tpu_custom_call.1} parent=5 // pred_check_branch
        %347 = sbr.rel (%p344) target = $region60
      $region59: #{tpu_custom_call.1} parent=5 // pred_region
        %s348 = ssub.s32 %s23, 1
        %s349 = sand.u32 %s36, 1
        %s350 = scalar_lea.sflag [#allocation3], %s349
        %s351 = sand.u32 %s36, 1
        %s352 = smul.addr %s351, 112
        %s353 = scalar_lea.vmem [#allocation2], %s352
        // Predicated region
        $region61: #{tpu_custom_call.1} parent=59 // pred_check
          %p354 = pneg %p49
        $region62: #{tpu_custom_call.1} parent=59 // pred_check_branch
          %356 = sbr.rel (%p354) target = $region64
        $region63: #{tpu_custom_call.1} parent=59 // pred_region
          %357 = dma.done %s350, 1792
        $region64: #{tpu_custom_call.1} parent=59 // pred_fallthru
          _
        // Predicated region
        $region65: #{tpu_custom_call.1} parent=59 // pred_check
          %p358 = pneg %p70
        $region66: #{tpu_custom_call.1} parent=59 // pred_check_branch
          %360 = sbr.rel (%p358) target = $region68
        $region67: #{tpu_custom_call.1} parent=59 // pred_region
          %361 = dma.done [#allocation6], 6272
        $region68: #{tpu_custom_call.1} parent=59 // pred_fallthru
          _
        %s362 = sand.u32 %s36, 1
        %s363 = scalar_lea.sflag [#allocation3], %s362
        %s364 = sand.u32 %s36, 1
        %s365 = smul.addr %s364, 112
        %s366 = scalar_lea.vmem [#allocation2], %s365
        %p367 = pneg %p49
        %p368 = pneg %p46
        %p369 = pneg %p70
        %p370 = pneg %p67
        %p371 = pneg %p91
        %p372 = pneg %p88
        %p373 = pneg %p112
        %p374 = pneg %p109
        %p375 = pneg %p133
        %p376 = pneg %p130
        %p377 = pneg %p154
        %p378 = pneg %p151
        %p379 = pneg %p175
        %p380 = pneg %p172
        %p381 = pneg %p196
        %p382 = pneg %p193
        %p383 = pneg %p217
        %p384 = pneg %p214
        %p385 = pneg %p238
        %p386 = pneg %p235
        %p387 = pneg %p264
        %p388 = pneg %p261
        %s389 = sand.u32 %s251, 1
        %s390 = scalar_lea.sflag [#allocation4], %s389
        %s391 = sand.u32 %s251, 1
        %s392 = smul.addr %s391, 32
        %s393 = scalar_lea.vmem [#allocation7], %s392
        %s394 = smul.u32 4, %s28
        %s395 = smul.u32 4, %s28
        %v397 = vld [vmem:[%s353] sm:$0xff]
        %v398 = vld [vmem:[%s353 + $0x8] sm:$0xff]
        %v399 = vld [vmem:[%s353 + $0x10] sm:$0xff]
        %v400 = vld [vmem:[%s353 + $0x18] sm:$0xf]
        %v401 = vld [vmem:[%s353 + $0x1c] sm:$0xff]
        %v402 = vld [vmem:[%s353 + $0x24] sm:$0xff]
        %v403 = vld [vmem:[%s353 + $0x2c] sm:$0xff]
        %v404 = vld [vmem:[%s353 + $0x34] sm:$0xf]
        %v405 = vld [vmem:[%s353 + $0x38] sm:$0xff]
        %v406 = vld [vmem:[%s353 + $0x40] sm:$0xff]
        %v407 = vld [vmem:[%s353 + $0x48] sm:$0xff]
        %v408 = vld [vmem:[%s353 + $0x50] sm:$0xf]
        %v409 = vld [vmem:[%s353 + $0x54] sm:$0xff]
        %v410 = vld [vmem:[%s353 + $0x5c] sm:$0xff]
        %v411 = vld [vmem:[%s353 + $0x64] sm:$0xff]
        %v412 = vld [vmem:[%s353 + $0x6c] sm:$0xf]
        %v413 = vld [vmem:[#allocation5] sm:$0xf]
        %v414 = vld [vmem:[#allocation5 + $0x4] sm:$0xf]
        %v415 = vld [vmem:[#allocation5 + $0x8] sm:$0xf]
        %v416 = vld [vmem:[#allocation5 + $0xc] sm:$0xf]
        %v417 = vld [vmem:[#allocation5 + $0x10] sm:$0xf]
        %v418 = vld [vmem:[#allocation5 + $0x14] sm:$0xf]
        %v419 = vld [vmem:[#allocation5 + $0x18] sm:$0xf]
        %v420 = vld [vmem:[#allocation5 + $0x1c] sm:$0xf]
        %v421 = vld [vmem:[#allocation5 + $0x20] sm:$0xf]
        %v422 = vld [vmem:[#allocation5 + $0x24] sm:$0xf]
        %v423 = vld [vmem:[#allocation5 + $0x28] sm:$0xf]
        %v424 = vld [vmem:[#allocation5 + $0x2c] sm:$0xf]
        %v425 = vld [vmem:[#allocation5 + $0x30] sm:$0xf]
        %v426 = vld [vmem:[#allocation5 + $0x34] sm:$0xf]
        %v427 = vld [vmem:[#allocation5 + $0x38] sm:$0xf]
        %v428 = vld [vmem:[#allocation5 + $0x3c] sm:$0xf]
        %v429 = vld [vmem:[#allocation5 + $0x40] sm:$0xf]
        %v430 = vld [vmem:[#allocation5 + $0x44] sm:$0xf]
        %v431 = vld [vmem:[#allocation5 + $0x48] sm:$0xf]
        %v432 = vld [vmem:[#allocation5 + $0x4c] sm:$0xf]
        %v433 = vld [vmem:[#allocation5 + $0x50] sm:$0xf]
        %v434 = vld [vmem:[#allocation5 + $0x54] sm:$0xf]
        %v435 = vld [vmem:[#allocation5 + $0x58] sm:$0xf]
        %v436 = vld [vmem:[#allocation5 + $0x5c] sm:$0xf]
        %v437 = vld [vmem:[#allocation5 + $0x60] sm:$0xf]
        %v438 = vld [vmem:[#allocation5 + $0x64] sm:$0xf]
        %v439 = vld [vmem:[#allocation5 + $0x68] sm:$0xf]
        %v440 = vld [vmem:[#allocation5 + $0x6c] sm:$0xf]
        %v441 = vld [vmem:[#allocation5 + $0x70] sm:$0xf]
        %v442 = vld [vmem:[#allocation5 + $0x74] sm:$0xf]
        %v443 = vld [vmem:[#allocation5 + $0x78] sm:$0xf]
        %v444 = vld [vmem:[#allocation5 + $0x7c] sm:$0xf]
        %v445 = vld [vmem:[#allocation5 + $0x80] sm:$0xf]
        %v446 = vld [vmem:[#allocation5 + $0x84] sm:$0xf]
        %v447 = vld [vmem:[#allocation5 + $0x88] sm:$0xf]
        %v448 = vld [vmem:[#allocation5 + $0x8c] sm:$0xf]
        %v449 = vld [vmem:[#allocation5 + $0x90] sm:$0xf]
        %v450 = vld [vmem:[#allocation5 + $0x94] sm:$0xf]
        %v451 = vld [vmem:[#allocation5 + $0x98] sm:$0xf]
        %v452 = vld [vmem:[#allocation5 + $0x9c] sm:$0xf]
        %v453 = vld [vmem:[#allocation5 + $0xa0] sm:$0xf]
        %v454 = vld [vmem:[#allocation5 + $0xa4] sm:$0xf]
        %v455 = vld [vmem:[#allocation5 + $0xa8] sm:$0xf]
        %v456 = vld [vmem:[#allocation5 + $0xac] sm:$0xf]
        %v457 = vld [vmem:[#allocation5 + $0xb0] sm:$0xf]
        %v458 = vld [vmem:[#allocation5 + $0xb4] sm:$0xf]
        %v459 = vld [vmem:[#allocation5 + $0xb8] sm:$0xf]
        %v460 = vld [vmem:[#allocation5 + $0xbc] sm:$0xf]
        %v461 = vld [vmem:[#allocation5 + $0xc0] sm:$0xf]
        %v462 = vld [vmem:[#allocation5 + $0xc4] sm:$0xf]
        %v463 = vld [vmem:[#allocation5 + $0xc8] sm:$0xf]
        %v464 = vld [vmem:[#allocation5 + $0xcc] sm:$0xf]
        %v465 = vld [vmem:[#allocation5 + $0xd0] sm:$0xf]
        %v466 = vld [vmem:[#allocation5 + $0xd4] sm:$0xf]
        %v467 = vld [vmem:[#allocation5 + $0xd8] sm:$0xf]
        %v468 = vld [vmem:[#allocation5 + $0xdc] sm:$0xf]
        %v469 = vld [vmem:[#allocation5 + $0xe0] sm:$0xf]
        %v470 = vld [vmem:[#allocation5 + $0xe4] sm:$0xf]
        %v471 = vld [vmem:[#allocation5 + $0xe8] sm:$0xf]
        %v472 = vld [vmem:[#allocation5 + $0xec] sm:$0xf]
        %v473 = vld [vmem:[#allocation5 + $0xf0] sm:$0xf]
        %v474 = vld [vmem:[#allocation5 + $0xf4] sm:$0xf]
        %v475 = vld [vmem:[#allocation5 + $0xf8] sm:$0xf]
        %v476 = vld [vmem:[#allocation5 + $0xfc] sm:$0xf]
        %v477 = vld [vmem:[#allocation5 + $0x100] sm:$0xf]
        %v478 = vld [vmem:[#allocation5 + $0x104] sm:$0xf]
        %v479 = vld [vmem:[#allocation5 + $0x108] sm:$0xf]
        %v480 = vld [vmem:[#allocation5 + $0x10c] sm:$0xf]
        %v481 = vld [vmem:[#allocation5 + $0x110] sm:$0xf]
        %v482 = vld [vmem:[#allocation5 + $0x114] sm:$0xf]
        %v483 = vld [vmem:[#allocation5 + $0x118] sm:$0xf]
        %v484 = vld [vmem:[#allocation5 + $0x11c] sm:$0xf]
        %v485 = vld [vmem:[#allocation5 + $0x120] sm:$0xf]
        %v486 = vld [vmem:[#allocation5 + $0x124] sm:$0xf]
        %v487 = vld [vmem:[#allocation5 + $0x128] sm:$0xf]
        %v488 = vld [vmem:[#allocation5 + $0x12c] sm:$0xf]
        %v489 = vld [vmem:[#allocation5 + $0x130] sm:$0xf]
        %v490 = vld [vmem:[#allocation5 + $0x134] sm:$0xf]
        %v491 = vld [vmem:[#allocation5 + $0x138] sm:$0xf]
        %v492 = vld [vmem:[#allocation5 + $0x13c] sm:$0xf]
        %v493 = vld [vmem:[#allocation5 + $0x140] sm:$0xf]
        %v494 = vld [vmem:[#allocation5 + $0x144] sm:$0xf]
        %v495 = vld [vmem:[#allocation5 + $0x148] sm:$0xf]
        %v496 = vld [vmem:[#allocation5 + $0x14c] sm:$0xf]
        %v497 = vld [vmem:[#allocation5 + $0x150] sm:$0xf]
        %v498 = vld [vmem:[#allocation5 + $0x154] sm:$0xf]
        %v499 = vld [vmem:[#allocation5 + $0x158] sm:$0xf]
        %v500 = vld [vmem:[#allocation5 + $0x15c] sm:$0xf]
        %v501 = vld [vmem:[#allocation5 + $0x160] sm:$0xf]
        %v502 = vld [vmem:[#allocation5 + $0x164] sm:$0xf]
        %v503 = vld [vmem:[#allocation5 + $0x168] sm:$0xf]
        %v504 = vld [vmem:[#allocation5 + $0x16c] sm:$0xf]
        %v505 = vld [vmem:[#allocation5 + $0x170] sm:$0xf]
        %v506 = vld [vmem:[#allocation5 + $0x174] sm:$0xf]
        %v507 = vld [vmem:[#allocation5 + $0x178] sm:$0xf]
        %v508 = vld [vmem:[#allocation5 + $0x17c] sm:$0xf]
        %v509 = vld [vmem:[#allocation5 + $0x180] sm:$0xf]
        %v510 = vld [vmem:[#allocation5 + $0x184] sm:$0xf]
        %v511 = vld [vmem:[%s2] sm:$0x1]
        %v513 = vlaneseq
        %v514 = vshrl.u32 %v513, 7
        %v515 = vsub.s32 0, %v514
        %v516 = vrot.slane %v511, %v515
        %v534 = vunpack.c.l.b16 %v397
        %v535 = vunpack.c.h.b16 %v397
        %v536 = vunpack.c.l.b16 %v398
        %v537 = vunpack.c.h.b16 %v398
        %v538 = vunpack.c.l.b16 %v399
        %v539 = vunpack.c.h.b16 %v399
        %v540 = vunpack.c.l.b16 %v400
        %v541 = vunpack.c.l.b16 %v401
        %v542 = vunpack.c.h.b16 %v401
        %v543 = vunpack.c.l.b16 %v402
        %v544 = vunpack.c.h.b16 %v402
        %v545 = vunpack.c.l.b16 %v403
        %v546 = vunpack.c.h.b16 %v403
        %v547 = vunpack.c.l.b16 %v404
        %v548 = vunpack.c.l.b16 %v405
        %v549 = vunpack.c.h.b16 %v405
        %v550 = vunpack.c.l.b16 %v406
        %v551 = vunpack.c.h.b16 %v406
        %v552 = vunpack.c.l.b16 %v407
        %v553 = vunpack.c.h.b16 %v407
        %v554 = vunpack.c.l.b16 %v408
        %v555 = vunpack.c.l.b16 %v409
        %v556 = vunpack.c.h.b16 %v409
        %v557 = vunpack.c.l.b16 %v410
        %v558 = vunpack.c.h.b16 %v410
        %v559 = vunpack.c.l.b16 %v411
        %v560 = vunpack.c.h.b16 %v411
        %v561 = vunpack.c.l.b16 %v412
        %v562 = vpack.c.b16 %v541, %v534
        %v563 = vpack.c.b16 %v542, %v535
        %v564 = vpack.c.b16 %v543, %v536
        %v565 = vpack.c.b16 %v544, %v537
        %v566 = vpack.c.b16 %v545, %v538
        %v567 = vpack.c.b16 %v546, %v539
        %v568 = vpack.c.b16 %v547, %v540
        %v569 = vpack.c.b16 %v555, %v548
        %v570 = vpack.c.b16 %v556, %v549
        %v571 = vpack.c.b16 %v557, %v550
        %v572 = vpack.c.b16 %v558, %v551
        %v573 = vpack.c.b16 %v559, %v552
        %v574 = vpack.c.b16 %v560, %v553
        %v575 = vpack.c.b16 %v561, %v554
        %v686 = vunpack.c.l.b16 %v413
        %v687 = vunpack.c.l.b16 %v414
        %v688 = vunpack.c.l.b16 %v415
        %v689 = vunpack.c.l.b16 %v416
        %v690 = vunpack.c.l.b16 %v417
        %v691 = vunpack.c.l.b16 %v418
        %v692 = vunpack.c.l.b16 %v419
        %v693 = vunpack.c.l.b16 %v420
        %v694 = vunpack.c.l.b16 %v421
        %v695 = vunpack.c.l.b16 %v422
        %v696 = vunpack.c.l.b16 %v423
        %v697 = vunpack.c.l.b16 %v424
        %v698 = vunpack.c.l.b16 %v425
        %v699 = vunpack.c.l.b16 %v426
        %v700 = vunpack.c.l.b16 %v427
        %v701 = vunpack.c.l.b16 %v428
        %v702 = vunpack.c.l.b16 %v429
        %v703 = vunpack.c.l.b16 %v430
        %v704 = vunpack.c.l.b16 %v431
        %v705 = vunpack.c.l.b16 %v432
        %v706 = vunpack.c.l.b16 %v433
        %v707 = vunpack.c.l.b16 %v434
        %v708 = vunpack.c.l.b16 %v435
        %v709 = vunpack.c.l.b16 %v436
        %v710 = vunpack.c.l.b16 %v437
        %v711 = vunpack.c.l.b16 %v438
        %v712 = vunpack.c.l.b16 %v439
        %v713 = vunpack.c.l.b16 %v440
        %v714 = vunpack.c.l.b16 %v441
        %v715 = vunpack.c.l.b16 %v442
        %v716 = vunpack.c.l.b16 %v443
        %v717 = vunpack.c.l.b16 %v444
        %v718 = vunpack.c.l.b16 %v445
        %v719 = vunpack.c.l.b16 %v446
        %v720 = vunpack.c.l.b16 %v447
        %v721 = vunpack.c.l.b16 %v448
        %v722 = vunpack.c.l.b16 %v449
        %v723 = vunpack.c.l.b16 %v450
        %v724 = vunpack.c.l.b16 %v451
        %v725 = vunpack.c.l.b16 %v452
        %v726 = vunpack.c.l.b16 %v453
        %v727 = vunpack.c.l.b16 %v454
        %v728 = vunpack.c.l.b16 %v455
        %v729 = vunpack.c.l.b16 %v456
        %v730 = vunpack.c.l.b16 %v457
        %v731 = vunpack.c.l.b16 %v458
        %v732 = vunpack.c.l.b16 %v459
        %v733 = vunpack.c.l.b16 %v460
        %v734 = vunpack.c.l.b16 %v461
        %v735 = vunpack.c.l.b16 %v462
        %v736 = vunpack.c.l.b16 %v463
        %v737 = vunpack.c.l.b16 %v464
        %v738 = vunpack.c.l.b16 %v465
        %v739 = vunpack.c.l.b16 %v466
        %v740 = vunpack.c.l.b16 %v467
        %v741 = vunpack.c.l.b16 %v468
        %v742 = vunpack.c.l.b16 %v469
        %v743 = vunpack.c.l.b16 %v470
        %v744 = vunpack.c.l.b16 %v471
        %v745 = vunpack.c.l.b16 %v472
        %v746 = vunpack.c.l.b16 %v473
        %v747 = vunpack.c.l.b16 %v474
        %v748 = vunpack.c.l.b16 %v475
        %v749 = vunpack.c.l.b16 %v476
        %v750 = vunpack.c.l.b16 %v477
        %v751 = vunpack.c.l.b16 %v478
        %v752 = vunpack.c.l.b16 %v479
        %v753 = vunpack.c.l.b16 %v480
        %v754 = vunpack.c.l.b16 %v481
        %v755 = vunpack.c.l.b16 %v482
        %v756 = vunpack.c.l.b16 %v483
        %v757 = vunpack.c.l.b16 %v484
        %v758 = vunpack.c.l.b16 %v485
        %v759 = vunpack.c.l.b16 %v486
        %v760 = vunpack.c.l.b16 %v487
        %v761 = vunpack.c.l.b16 %v488
        %v762 = vunpack.c.l.b16 %v489
        %v763 = vunpack.c.l.b16 %v490
        %v764 = vunpack.c.l.b16 %v491
        %v765 = vunpack.c.l.b16 %v492
        %v766 = vunpack.c.l.b16 %v493
        %v767 = vunpack.c.l.b16 %v494
        %v768 = vunpack.c.l.b16 %v495
        %v769 = vunpack.c.l.b16 %v496
        %v770 = vunpack.c.l.b16 %v497
        %v771 = vunpack.c.l.b16 %v498
        %v772 = vunpack.c.l.b16 %v499
        %v773 = vunpack.c.l.b16 %v500
        %v774 = vunpack.c.l.b16 %v501
        %v775 = vunpack.c.l.b16 %v502
        %v776 = vunpack.c.l.b16 %v503
        %v777 = vunpack.c.l.b16 %v504
        %v778 = vunpack.c.l.b16 %v505
        %v779 = vunpack.c.l.b16 %v506
        %v780 = vunpack.c.l.b16 %v507
        %v781 = vunpack.c.l.b16 %v508
        %v782 = vunpack.c.l.b16 %v509
        %v783 = vunpack.c.l.b16 %v510
        %v784 = vpack.c.b16 %v687, %v686
        %v785 = vpack.c.b16 %v689, %v688
        %v786 = vpack.c.b16 %v691, %v690
        %v787 = vpack.c.b16 %v693, %v692
        %v788 = vpack.c.b16 %v695, %v694
        %v789 = vpack.c.b16 %v697, %v696
        %v790 = vpack.c.b16 %v699, %v698
        %v791 = vpack.c.b16 %v701, %v700
        %v792 = vpack.c.b16 %v703, %v702
        %v793 = vpack.c.b16 %v705, %v704
        %v794 = vpack.c.b16 %v707, %v706
        %v795 = vpack.c.b16 %v709, %v708
        %v796 = vpack.c.b16 %v711, %v710
        %v797 = vpack.c.b16 %v713, %v712
        %v798 = vpack.c.b16 %v715, %v714
        %v799 = vpack.c.b16 %v717, %v716
        %v800 = vpack.c.b16 %v719, %v718
        %v801 = vpack.c.b16 %v721, %v720
        %v802 = vpack.c.b16 %v723, %v722
        %v803 = vpack.c.b16 %v725, %v724
        %v804 = vpack.c.b16 %v727, %v726
        %v805 = vpack.c.b16 %v729, %v728
        %v806 = vpack.c.b16 %v731, %v730
        %v807 = vpack.c.b16 %v733, %v732
        %v808 = vpack.c.b16 %v735, %v734
        %v809 = vpack.c.b16 %v737, %v736
        %v810 = vpack.c.b16 %v739, %v738
        %v811 = vpack.c.b16 %v741, %v740
        %v812 = vpack.c.b16 %v743, %v742
        %v813 = vpack.c.b16 %v745, %v744
        %v814 = vpack.c.b16 %v747, %v746
        %v815 = vpack.c.b16 %v749, %v748
        %v816 = vpack.c.b16 %v751, %v750
        %v817 = vpack.c.b16 %v753, %v752
        %v818 = vpack.c.b16 %v755, %v754
        %v819 = vpack.c.b16 %v757, %v756
        %v820 = vpack.c.b16 %v759, %v758
        %v821 = vpack.c.b16 %v761, %v760
        %v822 = vpack.c.b16 %v763, %v762
        %v823 = vpack.c.b16 %v765, %v764
        %v824 = vpack.c.b16 %v767, %v766
        %v825 = vpack.c.b16 %v769, %v768
        %v826 = vpack.c.b16 %v771, %v770
        %v827 = vpack.c.b16 %v773, %v772
        %v828 = vpack.c.b16 %v775, %v774
        %v829 = vpack.c.b16 %v777, %v776
        %v830 = vpack.c.b16 %v779, %v778
        %v831 = vpack.c.b16 %v781, %v780
        %v832 = vpack.c.b16 %v783, %v782
        %vm882 = vcmask 130048
        %v884 = vsel %vm882, %v568, 0
        %v887 = vsel %vm882, %v575, 0
        %889 = vmatprep.subr.bf16.mxu0 0
        %890 = vmatpush1.bf16.msra.mxu0 %v784
        %891 = vmatprep.subr.bf16.mxu0 0
        %892 = vmatpush1.bf16.msra.mxu0 %v785
        %893 = vmatprep.subr.bf16.mxu0 0
        %894 = vmatpush1.bf16.msra.mxu0 %v786
        %895 = vmatprep.subr.bf16.mxu0 0
        %896 = vmatpush1.bf16.msra.mxu0 %v787
        %897 = vmatprep.subr.bf16.mxu0 0
        %898 = vmatpush1.bf16.msra.mxu0 %v788
        %899 = vmatprep.subr.bf16.mxu0 0
        %900 = vmatpush1.bf16.msra.mxu0 %v789
        %901 = vmatprep.subr.bf16.mxu0 0
        %902 = vmatpush1.bf16.msra.mxu0 %v790
        %903 = vmatprep.subr.bf16.mxu0 0
        %904 = vmatpush1.bf16.msra.mxu0 %v791
        %905 = vmatprep.subr.bf16.mxu0 0
        %906 = vmatpush1.bf16.msra.mxu0 %v792
        %907 = vmatprep.subr.bf16.mxu0 0
        %908 = vmatpush1.bf16.msra.mxu0 %v793
        %909 = vmatprep.subr.bf16.mxu0 0
        %910 = vmatpush1.bf16.msra.mxu0 %v794
        %911 = vmatprep.subr.bf16.mxu0 0
        %912 = vmatpush1.bf16.msra.mxu0 %v795
        %913 = vmatprep.subr.bf16.mxu0 0
        %914 = vmatpush1.bf16.msra.mxu0 %v796
        %915 = vmatprep.subr.bf16.mxu0 0
        %916 = vmatpush1.bf16.msra.mxu0 %v797
        %917 = vmatprep.subr.bf16.mxu0 0
        %918 = vmatpush1.bf16.msra.mxu0 %v798
        %919 = vmatprep.subr.bf16.mxu0 0
        %920 = vmatpush1.bf16.msra.mxu0 %v799
        %921 = vmatprep.mubr.bf16.mxu0 %v563
        %922 = vmatmul.mubr.bf16.gmra.mrb[0].mxu0 %v562
        %v923 = vpop.f32.mrb[0].mxu0
        %v924 = vadd.f32 %v516, %v923
        %v925 = vpop.f32.mrb[0].mxu0
        %v926 = vpop.f32.mrb[0].mxu0
        %v927 = vadd.f32 %v516, %v926
        %v928 = vpop.f32.mrb[0].mxu0
        %929 = vmatprep.mubr.bf16.mxu0 %v570
        %930 = vmatmul.mubr.bf16.gmra.mrb[0].mxu0 %v569
        %v931 = vpop.f32.mrb[0].mxu0
        %v932 = vadd.f32 %v516, %v931
        %v933 = vpop.f32.mrb[0].mxu0
        %v934 = vpop.f32.mrb[0].mxu0
        %v935 = vadd.f32 %v516, %v934
        %v936 = vpop.f32.mrb[0].mxu0
        %937 = vdwg.mxu0
        %938 = vmatprep.subr.bf16.mxu0 0
        %939 = vmatpush1.bf16.msra.mxu0 %v800
        %940 = vmatprep.subr.bf16.mxu0 0
        %941 = vmatpush1.bf16.msra.mxu0 %v801
        %942 = vmatprep.subr.bf16.mxu0 0
        %943 = vmatpush1.bf16.msra.mxu0 %v802
        %944 = vmatprep.subr.bf16.mxu0 0
        %945 = vmatpush1.bf16.msra.mxu0 %v803
        %946 = vmatprep.subr.bf16.mxu0 0
        %947 = vmatpush1.bf16.msra.mxu0 %v804
        %948 = vmatprep.subr.bf16.mxu0 0
        %949 = vmatpush1.bf16.msra.mxu0 %v805
        %950 = vmatprep.subr.bf16.mxu0 0
        %951 = vmatpush1.bf16.msra.mxu0 %v806
        %952 = vmatprep.subr.bf16.mxu0 0
        %953 = vmatpush1.bf16.msra.mxu0 %v807
        %954 = vmatprep.subr.bf16.mxu0 0
        %955 = vmatpush1.bf16.msra.mxu0 %v808
        %956 = vmatprep.subr.bf16.mxu0 0
        %957 = vmatpush1.bf16.msra.mxu0 %v809
        %958 = vmatprep.subr.bf16.mxu0 0
        %959 = vmatpush1.bf16.msra.mxu0 %v810
        %960 = vmatprep.subr.bf16.mxu0 0
        %961 = vmatpush1.bf16.msra.mxu0 %v811
        %962 = vmatprep.subr.bf16.mxu0 0
        %963 = vmatpush1.bf16.msra.mxu0 %v812
        %964 = vmatprep.subr.bf16.mxu0 0
        %965 = vmatpush1.bf16.msra.mxu0 %v813
        %966 = vmatprep.subr.bf16.mxu0 0
        %967 = vmatpush1.bf16.msra.mxu0 %v814
        %968 = vmatprep.subr.bf16.mxu0 0
        %969 = vmatpush1.bf16.msra.mxu0 %v815
        %970 = vmatprep.mubr.bf16.mxu0 %v565
        %971 = vmatmul.mubr.bf16.gmra.mrb[0].mxu0 %v564
        %v972 = vpop.f32.mrb[0].mxu0
        %v973 = vadd.f32 %v924, %v972
        %v974 = vpop.f32.mrb[0].mxu0
        %v975 = vpop.f32.mrb[0].mxu0
        %v976 = vadd.f32 %v927, %v975
        %v977 = vpop.f32.mrb[0].mxu0
        %978 = vmatprep.mubr.bf16.mxu0 %v572
        %979 = vmatmul.mubr.bf16.gmra.mrb[0].mxu0 %v571
        %v980 = vpop.f32.mrb[0].mxu0
        %v981 = vadd.f32 %v932, %v980
        %v982 = vpop.f32.mrb[0].mxu0
        %v983 = vpop.f32.mrb[0].mxu0
        %v984 = vadd.f32 %v935, %v983
        %v985 = vpop.f32.mrb[0].mxu0
        %986 = vdwg.mxu0
        %987 = vmatprep.subr.bf16.mxu0 0
        %988 = vmatpush1.bf16.msra.mxu0 %v816
        %989 = vmatprep.subr.bf16.mxu0 0
        %990 = vmatpush1.bf16.msra.mxu0 %v817
        %991 = vmatprep.subr.bf16.mxu0 0
        %992 = vmatpush1.bf16.msra.mxu0 %v818
        %993 = vmatprep.subr.bf16.mxu0 0
        %994 = vmatpush1.bf16.msra.mxu0 %v819
        %995 = vmatprep.subr.bf16.mxu0 0
        %996 = vmatpush1.bf16.msra.mxu0 %v820
        %997 = vmatprep.subr.bf16.mxu0 0
        %998 = vmatpush1.bf16.msra.mxu0 %v821
        %999 = vmatprep.subr.bf16.mxu0 0
        %1000 = vmatpush1.bf16.msra.mxu0 %v822
        %1001 = vmatprep.subr.bf16.mxu0 0
        %1002 = vmatpush1.bf16.msra.mxu0 %v823
        %1003 = vmatprep.subr.bf16.mxu0 0
        %1004 = vmatpush1.bf16.msra.mxu0 %v824
        %1005 = vmatprep.subr.bf16.mxu0 0
        %1006 = vmatpush1.bf16.msra.mxu0 %v825
        %1007 = vmatprep.subr.bf16.mxu0 0
        %1008 = vmatpush1.bf16.msra.mxu0 %v826
        %1009 = vmatprep.subr.bf16.mxu0 0
        %1010 = vmatpush1.bf16.msra.mxu0 %v827
        %1011 = vmatprep.subr.bf16.mxu0 0
        %1012 = vmatpush1.bf16.msra.mxu0 %v828
        %1013 = vmatprep.subr.bf16.mxu0 0
        %1014 = vmatpush1.bf16.msra.mxu0 %v829
        %1015 = vmatprep.subr.bf16.mxu0 0
        %1016 = vmatpush1.bf16.msra.mxu0 %v830
        %1017 = vmatprep.subr.bf16.mxu0 0
        %1018 = vmatpush1.bf16.msra.mxu0 %v831
        %1019 = vmatprep.mubr.bf16.mxu0 %v567
        %1020 = vmatmul.mubr.bf16.gmra.mrb[0].mxu0 %v566
        %v1021 = vpop.f32.mrb[0].mxu0
        %v1022 = vadd.f32 %v973, %v1021
        %v1023 = vpop.f32.mrb[0].mxu0
        %v1024 = vpop.f32.mrb[0].mxu0
        %v1025 = vadd.f32 %v976, %v1024
        %v1026 = vpop.f32.mrb[0].mxu0
        %1027 = vmatprep.mubr.bf16.mxu0 %v574
        %1028 = vmatmul.mubr.bf16.gmra.mrb[0].mxu0 %v573
        %v1029 = vpop.f32.mrb[0].mxu0
        %v1030 = vadd.f32 %v981, %v1029
        %v1031 = vpop.f32.mrb[0].mxu0
        %v1032 = vpop.f32.mrb[0].mxu0
        %v1033 = vadd.f32 %v984, %v1032
        %v1034 = vpop.f32.mrb[0].mxu0
        %1035 = vdwg.mxu0
        %1036 = vmatprep.subr.bf16.mxu0 0
        %1037 = vmatpush1.bf16.msra.mxu0 %v832
        %1038 = vmatprep.subr.bf16.mxu0 0
        %1039 = vmatpush1.bf16.msra.mxu0 0
        %1040 = vmatprep.subr.bf16.mxu0 0
        %1041 = vmatpush1.bf16.msra.mxu0 0
        %1042 = vmatprep.subr.bf16.mxu0 0
        %1043 = vmatpush1.bf16.msra.mxu0 0
        %1044 = vmatprep.subr.bf16.mxu0 0
        %1045 = vmatpush1.bf16.msra.mxu0 0
        %1046 = vmatprep.subr.bf16.mxu0 0
        %1047 = vmatpush1.bf16.msra.mxu0 0
        %1048 = vmatprep.subr.bf16.mxu0 0
        %1049 = vmatpush1.bf16.msra.mxu0 0
        %1050 = vmatprep.subr.bf16.mxu0 0
        %1051 = vmatpush1.bf16.msra.mxu0 0
        %1052 = vmatprep.subr.bf16.mxu0 0
        %1053 = vmatpush1.bf16.msra.mxu0 0
        %1054 = vmatprep.subr.bf16.mxu0 0
        %1055 = vmatpush1.bf16.msra.mxu0 0
        %1056 = vmatprep.subr.bf16.mxu0 0
        %1057 = vmatpush1.bf16.msra.mxu0 0
        %1058 = vmatprep.subr.bf16.mxu0 0
        %1059 = vmatpush1.bf16.msra.mxu0 0
        %1060 = vmatprep.subr.bf16.mxu0 0
        %1061 = vmatpush1.bf16.msra.mxu0 0
        %1062 = vmatprep.subr.bf16.mxu0 0
        %1063 = vmatpush1.bf16.msra.mxu0 0
        %1064 = vmatprep.subr.bf16.mxu0 0
        %1065 = vmatpush1.bf16.msra.mxu0 0
        %1066 = vmatprep.subr.bf16.mxu0 0
        %1067 = vmatpush1.bf16.msra.mxu0 0
        %1068 = vmatprep.mubr.bf16.mxu0 0
        %1069 = vmatmul.mubr.bf16.gmra.mrb[0].mxu0 %v884
        %v1070 = vpop.f32.mrb[0].mxu0
        %v1071 = vadd.f32 %v1022, %v1070
        %v1072 = vpop.f32.mrb[0].mxu0
        %v1073 = vpop.f32.mrb[0].mxu0
        %v1074 = vadd.f32 %v1025, %v1073
        %v1075 = vpop.f32.mrb[0].mxu0
        %1076 = vmatprep.mubr.bf16.mxu0 0
        %1077 = vmatmul.mubr.bf16.gmra.mrb[0].mxu0 %v887
        %v1078 = vpop.f32.mrb[0].mxu0
        %v1079 = vadd.f32 %v1030, %v1078
        %v1080 = vpop.f32.mrb[0].mxu0
        %v1081 = vpop.f32.mrb[0].mxu0
        %v1082 = vadd.f32 %v1033, %v1081
        %v1083 = vpop.f32.mrb[0].mxu0
        %1084 = vdwg.mxu0
        %v1085 = vld [vmem:[%s3] sm:$0xf]
        %v1086 = vpack.c.bf16 %v1074, %v1071
        %v1087 = vpack.c.bf16 %v1082, %v1079
        %v1088 = vld [vmem:[%s4] sm:$0xf]
        %v1089 = vld [vmem:[%s4 + $0x4] sm:$0xf]
        %v1090 = vld [vmem:[%s4 + $0x8] sm:$0xf]
        %v1091 = vld [vmem:[%s4 + $0xc] sm:$0xf]
        %v1092 = vld [vmem:[%s4 + $0x10] sm:$0xf]
        %v1093 = vld [vmem:[%s4 + $0x14] sm:$0xf]
        %v1094 = vld [vmem:[%s4 + $0x18] sm:$0xf]
        %v1095 = vld [vmem:[%s4 + $0x1c] sm:$0xf]
        %v1096 = vld [vmem:[%s4 + $0x20] sm:$0xf]
        %v1097 = vld [vmem:[%s4 + $0x24] sm:$0xf]
        %v1098 = vld [vmem:[%s4 + $0x28] sm:$0xf]
        %v1099 = vld [vmem:[%s4 + $0x2c] sm:$0xf]
        %v1100 = vld [vmem:[%s4 + $0x30] sm:$0xf]
        %v1101 = vld [vmem:[%s4 + $0x34] sm:$0xf]
        %v1102 = vld [vmem:[%s4 + $0x38] sm:$0xf]
        %v1103 = vld [vmem:[%s4 + $0x3c] sm:$0xf]
        %v1104 = vld [vmem:[%s5] sm:$0x1]
        %v1106 = vlaneseq
        %v1107 = vshrl.u32 %v1106, 7
        %v1108 = vsub.s32 0, %v1107
        %v1109 = vrot.slane %v1104, %v1108
        %v1127 = vunpack.c.l.b16 %v1088
        %v1128 = vunpack.c.l.b16 %v1089
        %v1129 = vunpack.c.l.b16 %v1090
        %v1130 = vunpack.c.l.b16 %v1091
        %v1131 = vunpack.c.l.b16 %v1092
        %v1132 = vunpack.c.l.b16 %v1093
        %v1133 = vunpack.c.l.b16 %v1094
        %v1134 = vunpack.c.l.b16 %v1095
        %v1135 = vunpack.c.l.b16 %v1096
        %v1136 = vunpack.c.l.b16 %v1097
        %v1137 = vunpack.c.l.b16 %v1098
        %v1138 = vunpack.c.l.b16 %v1099
        %v1139 = vunpack.c.l.b16 %v1100
        %v1140 = vunpack.c.l.b16 %v1101
        %v1141 = vunpack.c.l.b16 %v1102
        %v1142 = vunpack.c.l.b16 %v1103
        %v1143 = vpack.c.b16 %v1128, %v1127
        %v1144 = vpack.c.b16 %v1130, %v1129
        %v1145 = vpack.c.b16 %v1132, %v1131
        %v1146 = vpack.c.b16 %v1134, %v1133
        %v1147 = vpack.c.b16 %v1136, %v1135
        %v1148 = vpack.c.b16 %v1138, %v1137
        %v1149 = vpack.c.b16 %v1140, %v1139
        %v1150 = vpack.c.b16 %v1142, %v1141
        %1159 = vmatprep.subr.bf16.mxu0 0
        %1160 = vmatpush1.bf16.msra.mxu0 %v1143
        %1161 = vmatprep.subr.bf16.mxu0 0
        %1162 = vmatpush1.bf16.msra.mxu0 %v1144
        %1163 = vmatprep.subr.bf16.mxu0 0
        %1164 = vmatpush1.bf16.msra.mxu0 %v1145
        %1165 = vmatprep.subr.bf16.mxu0 0
        %1166 = vmatpush1.bf16.msra.mxu0 %v1146
        %1167 = vmatprep.subr.bf16.mxu0 0
        %1168 = vmatpush1.bf16.msra.mxu0 %v1147
        %1169 = vmatprep.subr.bf16.mxu0 0
        %1170 = vmatpush1.bf16.msra.mxu0 %v1148
        %1171 = vmatprep.subr.bf16.mxu0 0
        %1172 = vmatpush1.bf16.msra.mxu0 %v1149
        %1173 = vmatprep.subr.bf16.mxu0 0
        %1174 = vmatpush1.bf16.msra.mxu0 %v1150
        %1175 = vmatprep.subr.bf16.mxu0 0
        %1176 = vmatpush1.bf16.msra.mxu0 0
        %1177 = vmatprep.subr.bf16.mxu0 0
        %1178 = vmatpush1.bf16.msra.mxu0 0
        %1179 = vmatprep.subr.bf16.mxu0 0
        %1180 = vmatpush1.bf16.msra.mxu0 0
        %1181 = vmatprep.subr.bf16.mxu0 0
        %1182 = vmatpush1.bf16.msra.mxu0 0
        %1183 = vmatprep.subr.bf16.mxu0 0
        %1184 = vmatpush1.bf16.msra.mxu0 0
        %1185 = vmatprep.subr.bf16.mxu0 0
        %1186 = vmatpush1.bf16.msra.mxu0 0
        %1187 = vmatprep.subr.bf16.mxu0 0
        %1188 = vmatpush1.bf16.msra.mxu0 0
        %1189 = vmatprep.subr.bf16.mxu0 0
        %1190 = vmatpush1.bf16.msra.mxu0 0
        %1191 = vmatprep.mubr.bf16.mxu0 0
        %1192 = vmatmul.mubr.bf16.gmra.mrb[0].mxu0 %v1086
        %v1193 = vpop.f32.mrb[0].mxu0
        %v1194 = vadd.f32 %v1109, %v1193
        %v1195 = vpop.f32.mrb[0].mxu0
        %v1196 = vpop.f32.mrb[0].mxu0
        %v1197 = vadd.f32 %v1109, %v1196
        %v1198 = vpop.f32.mrb[0].mxu0
        %1199 = vmatprep.mubr.bf16.mxu0 0
        %1200 = vmatmul.mubr.bf16.gmra.mrb[0].mxu0 %v1087
        %v1201 = vpop.f32.mrb[0].mxu0
        %v1202 = vadd.f32 %v1109, %v1201
        %v1203 = vpop.f32.mrb[0].mxu0
        %v1204 = vpop.f32.mrb[0].mxu0
        %v1205 = vadd.f32 %v1109, %v1204
        %v1206 = vpop.f32.mrb[0].mxu0
        %1207 = vdwg.mxu0
        %v1208 = vlaneseq
        %v1209 = vshrl.u32 %v1208, 7
        %v1210 = vsub.s32 0, %v1209
        %v1211 = vrot.slane %v1085, %v1210
        %v1212 = vmul.f32 %v1194, %v1211
        %v1213 = vmul.f32 %v1197, %v1211
        %v1214 = vmul.f32 %v1202, %v1211
        %v1215 = vmul.f32 %v1205, %v1211
        %v1216 = vpack.c.bf16 %v1213, %v1212
        %v1217 = vpack.c.bf16 %v1215, %v1214
        %v1218 = vld [vmem:[%s6] sm:$0xf]
        %v1219 = vld [vmem:[%s6 + $0x4] sm:$0xf]
        %v1220 = vld [vmem:[%s7] sm:$0x1]
        %v1222 = vlaneseq
        %v1223 = vshrl.u32 %v1222, 7
        %v1224 = vsub.s32 0, %v1223
        %v1225 = vrot.slane %v1220, %v1224
        %v1229 = vunpack.c.l.b16 %v1218
        %v1230 = vunpack.c.l.b16 %v1219
        %v1231 = vpack.c.b16 %v1230, %v1229
        %v1234 = vsel %vm882, %v1216, 0
        %v1237 = vsel %vm882, %v1217, 0
        %1239 = vmatprep.subr.bf16.mxu0 0
        %1240 = vmatpush1.bf16.msra.mxu0 %v1231
        %1241 = vmatprep.subr.bf16.mxu0 0
        %1242 = vmatpush1.bf16.msra.mxu0 0
        %1243 = vmatprep.subr.bf16.mxu0 0
        %1244 = vmatpush1.bf16.msra.mxu0 0
        %1245 = vmatprep.subr.bf16.mxu0 0
        %1246 = vmatpush1.bf16.msra.mxu0 0
        %1247 = vmatprep.subr.bf16.mxu0 0
        %1248 = vmatpush1.bf16.msra.mxu0 0
        %1249 = vmatprep.subr.bf16.mxu0 0
        %1250 = vmatpush1.bf16.msra.mxu0 0
        %1251 = vmatprep.subr.bf16.mxu0 0
        %1252 = vmatpush1.bf16.msra.mxu0 0
        %1253 = vmatprep.subr.bf16.mxu0 0
        %1254 = vmatpush1.bf16.msra.mxu0 0
        %1255 = vmatprep.subr.bf16.mxu0 0
        %1256 = vmatpush1.bf16.msra.mxu0 0
        %1257 = vmatprep.subr.bf16.mxu0 0
        %1258 = vmatpush1.bf16.msra.mxu0 0
        %1259 = vmatprep.subr.bf16.mxu0 0
        %1260 = vmatpush1.bf16.msra.mxu0 0
        %1261 = vmatprep.subr.bf16.mxu0 0
        %1262 = vmatpush1.bf16.msra.mxu0 0
        %1263 = vmatprep.subr.bf16.mxu0 0
        %1264 = vmatpush1.bf16.msra.mxu0 0
        %1265 = vmatprep.subr.bf16.mxu0 0
        %1266 = vmatpush1.bf16.msra.mxu0 0
        %1267 = vmatprep.subr.bf16.mxu0 0
        %1268 = vmatpush1.bf16.msra.mxu0 0
        %1269 = vmatprep.subr.bf16.mxu0 0
        %1270 = vmatpush1.bf16.msra.mxu0 0
        %1271 = vmatprep.mubr.bf16.mxu0 0
        %1272 = vmatmul.mubr.bf16.gmra.mrb[0].mxu0 %v1234
        %v1273 = vpop.f32.mrb[0].mxu0
        %v1274 = vadd.f32 %v1225, %v1273
        %v1275 = vpop.f32.mrb[0].mxu0
        %v1276 = vpop.f32.mrb[0].mxu0
        %v1277 = vadd.f32 %v1225, %v1276
        %v1278 = vpop.f32.mrb[0].mxu0
        %1279 = vmatprep.mubr.bf16.mxu0 0
        %1280 = vmatmul.mubr.bf16.gmra.mrb[0].mxu0 %v1237
        %v1281 = vpop.f32.mrb[0].mxu0
        %v1282 = vadd.f32 %v1225, %v1281
        %v1283 = vpop.f32.mrb[0].mxu0
        %v1284 = vpop.f32.mrb[0].mxu0
        %v1285 = vadd.f32 %v1225, %v1284
        %v1286 = vpop.f32.mrb[0].mxu0
        %1287 = vdwg.mxu0
        %v1288 = vadd.f32 %v1071, %v1274
        %v1289 = vadd.f32 %v1074, %v1277
        %v1290 = vadd.f32 %v1079, %v1282
        %v1291 = vadd.f32 %v1082, %v1285
        %v1292 = vpack.c.bf16 %v1289, %v1288
        %v1293 = vpack.c.bf16 %v1291, %v1290
        %1294 = vmatprep.subr.bf16.mxu0 0
        %1295 = vmatpush1.bf16.msra.mxu0 %v1143
        %1296 = vmatprep.subr.bf16.mxu0 0
        %1297 = vmatpush1.bf16.msra.mxu0 %v1144
        %1298 = vmatprep.subr.bf16.mxu0 0
        %1299 = vmatpush1.bf16.msra.mxu0 %v1145
        %1300 = vmatprep.subr.bf16.mxu0 0
        %1301 = vmatpush1.bf16.msra.mxu0 %v1146
        %1302 = vmatprep.subr.bf16.mxu0 0
        %1303 = vmatpush1.bf16.msra.mxu0 %v1147
        %1304 = vmatprep.subr.bf16.mxu0 0
        %1305 = vmatpush1.bf16.msra.mxu0 %v1148
        %1306 = vmatprep.subr.bf16.mxu0 0
        %1307 = vmatpush1.bf16.msra.mxu0 %v1149
        %1308 = vmatprep.subr.bf16.mxu0 0
        %1309 = vmatpush1.bf16.msra.mxu0 %v1150
        %1310 = vmatprep.subr.bf16.mxu0 0
        %1311 = vmatpush1.bf16.msra.mxu0 0
        %1312 = vmatprep.subr.bf16.mxu0 0
        %1313 = vmatpush1.bf16.msra.mxu0 0
        %1314 = vmatprep.subr.bf16.mxu0 0
        %1315 = vmatpush1.bf16.msra.mxu0 0
        %1316 = vmatprep.subr.bf16.mxu0 0
        %1317 = vmatpush1.bf16.msra.mxu0 0
        %1318 = vmatprep.subr.bf16.mxu0 0
        %1319 = vmatpush1.bf16.msra.mxu0 0
        %1320 = vmatprep.subr.bf16.mxu0 0
        %1321 = vmatpush1.bf16.msra.mxu0 0
        %1322 = vmatprep.subr.bf16.mxu0 0
        %1323 = vmatpush1.bf16.msra.mxu0 0
        %1324 = vmatprep.subr.bf16.mxu0 0
        %1325 = vmatpush1.bf16.msra.mxu0 0
        %1326 = vmatprep.mubr.bf16.mxu0 0
        %1327 = vmatmul.mubr.bf16.gmra.mrb[0].mxu0 %v1292
        %v1328 = vpop.f32.mrb[0].mxu0
        %v1329 = vadd.f32 %v1109, %v1328
        %v1330 = vpop.f32.mrb[0].mxu0
        %v1331 = vpop.f32.mrb[0].mxu0
        %v1332 = vadd.f32 %v1109, %v1331
        %v1333 = vpop.f32.mrb[0].mxu0
        %1334 = vmatprep.mubr.bf16.mxu0 0
        %1335 = vmatmul.mubr.bf16.gmra.mrb[0].mxu0 %v1293
        %v1336 = vpop.f32.mrb[0].mxu0
        %v1337 = vadd.f32 %v1109, %v1336
        %v1338 = vpop.f32.mrb[0].mxu0
        %v1339 = vpop.f32.mrb[0].mxu0
        %v1340 = vadd.f32 %v1109, %v1339
        %v1341 = vpop.f32.mrb[0].mxu0
        %1342 = vdwg.mxu0
        %v1343 = vlaneseq
        %v1344 = vshrl.u32 %v1343, 7
        %v1345 = vsub.s32 1, %v1344
        %v1346 = vrot.slane %v1085, %v1345
        %v1347 = vmul.f32 %v1329, %v1346
        %v1348 = vmul.f32 %v1332, %v1346
        %v1349 = vmul.f32 %v1337, %v1346
        %v1350 = vmul.f32 %v1340, %v1346
        %v1351 = vpack.c.bf16 %v1348, %v1347
        %v1352 = vpack.c.bf16 %v1350, %v1349
        %v1354 = vsel %vm882, %v1351, 0
        %v1357 = vsel %vm882, %v1352, 0
        %1359 = vmatprep.subr.bf16.mxu0 0
        %1360 = vmatpush1.bf16.msra.mxu0 %v1231
        %1361 = vmatprep.subr.bf16.mxu0 0
        %1362 = vmatpush1.bf16.msra.mxu0 0
        %1363 = vmatprep.subr.bf16.mxu0 0
        %1364 = vmatpush1.bf16.msra.mxu0 0
        %1365 = vmatprep.subr.bf16.mxu0 0
        %1366 = vmatpush1.bf16.msra.mxu0 0
        %1367 = vmatprep.subr.bf16.mxu0 0
        %1368 = vmatpush1.bf16.msra.mxu0 0
        %1369 = vmatprep.subr.bf16.mxu0 0
        %1370 = vmatpush1.bf16.msra.mxu0 0
        %1371 = vmatprep.subr.bf16.mxu0 0
        %1372 = vmatpush1.bf16.msra.mxu0 0
        %1373 = vmatprep.subr.bf16.mxu0 0
        %1374 = vmatpush1.bf16.msra.mxu0 0
        %1375 = vmatprep.subr.bf16.mxu0 0
        %1376 = vmatpush1.bf16.msra.mxu0 0
        %1377 = vmatprep.subr.bf16.mxu0 0
        %1378 = vmatpush1.bf16.msra.mxu0 0
        %1379 = vmatprep.subr.bf16.mxu0 0
        %1380 = vmatpush1.bf16.msra.mxu0 0
        %1381 = vmatprep.subr.bf16.mxu0 0
        %1382 = vmatpush1.bf16.msra.mxu0 0
        %1383 = vmatprep.subr.bf16.mxu0 0
        %1384 = vmatpush1.bf16.msra.mxu0 0
        %1385 = vmatprep.subr.bf16.mxu0 0
        %1386 = vmatpush1.bf16.msra.mxu0 0
        %1387 = vmatprep.subr.bf16.mxu0 0
        %1388 = vmatpush1.bf16.msra.mxu0 0
        %1389 = vmatprep.subr.bf16.mxu0 0
        %1390 = vmatpush1.bf16.msra.mxu0 0
        %1391 = vmatprep.mubr.bf16.mxu0 0
        %1392 = vmatmul.mubr.bf16.gmra.mrb[0].mxu0 %v1354
        %v1393 = vpop.f32.mrb[0].mxu0
        %v1394 = vadd.f32 %v1225, %v1393
        %v1395 = vpop.f32.mrb[0].mxu0
        %v1396 = vpop.f32.mrb[0].mxu0
        %v1397 = vadd.f32 %v1225, %v1396
        %v1398 = vpop.f32.mrb[0].mxu0
        %1399 = vmatprep.mubr.bf16.mxu0 0
        %1400 = vmatmul.mubr.bf16.gmra.mrb[0].mxu0 %v1357
        %v1401 = vpop.f32.mrb[0].mxu0
        %v1402 = vadd.f32 %v1225, %v1401
        %v1403 = vpop.f32.mrb[0].mxu0
        %v1404 = vpop.f32.mrb[0].mxu0
        %v1405 = vadd.f32 %v1225, %v1404
        %v1406 = vpop.f32.mrb[0].mxu0
        %1407 = vdwg.mxu0
        %v1408 = vadd.f32 %v1288, %v1394
        %v1409 = vadd.f32 %v1289, %v1397
        %v1410 = vadd.f32 %v1290, %v1402
        %v1411 = vadd.f32 %v1291, %v1405
        %v1412 = vpack.c.bf16 %v1409, %v1408
        %v1413 = vpack.c.bf16 %v1411, %v1410
        %1414 = vmatprep.subr.bf16.mxu0 0
        %1415 = vmatpush1.bf16.msra.mxu0 %v1143
        %1416 = vmatprep.subr.bf16.mxu0 0
        %1417 = vmatpush1.bf16.msra.mxu0 %v1144
        %1418 = vmatprep.subr.bf16.mxu0 0
        %1419 = vmatpush1.bf16.msra.mxu0 %v1145
        %1420 = vmatprep.subr.bf16.mxu0 0
        %1421 = vmatpush1.bf16.msra.mxu0 %v1146
        %1422 = vmatprep.subr.bf16.mxu0 0
        %1423 = vmatpush1.bf16.msra.mxu0 %v1147
        %1424 = vmatprep.subr.bf16.mxu0 0
        %1425 = vmatpush1.bf16.msra.mxu0 %v1148
        %1426 = vmatprep.subr.bf16.mxu0 0
        %1427 = vmatpush1.bf16.msra.mxu0 %v1149
        %1428 = vmatprep.subr.bf16.mxu0 0
        %1429 = vmatpush1.bf16.msra.mxu0 %v1150
        %1430 = vmatprep.subr.bf16.mxu0 0
        %1431 = vmatpush1.bf16.msra.mxu0 0
        %1432 = vmatprep.subr.bf16.mxu0 0
        %1433 = vmatpush1.bf16.msra.mxu0 0
        %1434 = vmatprep.subr.bf16.mxu0 0
        %1435 = vmatpush1.bf16.msra.mxu0 0
        %1436 = vmatprep.subr.bf16.mxu0 0
        %1437 = vmatpush1.bf16.msra.mxu0 0
        %1438 = vmatprep.subr.bf16.mxu0 0
        %1439 = vmatpush1.bf16.msra.mxu0 0
        %1440 = vmatprep.subr.bf16.mxu0 0
        %1441 = vmatpush1.bf16.msra.mxu0 0
        %1442 = vmatprep.subr.bf16.mxu0 0
        %1443 = vmatpush1.bf16.msra.mxu0 0
        %1444 = vmatprep.subr.bf16.mxu0 0
        %1445 = vmatpush1.bf16.msra.mxu0 0
        %1446 = vmatprep.mubr.bf16.mxu0 0
        %1447 = vmatmul.mubr.bf16.gmra.mrb[0].mxu0 %v1412
        %v1448 = vpop.f32.mrb[0].mxu0
        %v1449 = vadd.f32 %v1109, %v1448
        %v1450 = vpop.f32.mrb[0].mxu0
        %v1451 = vpop.f32.mrb[0].mxu0
        %v1452 = vadd.f32 %v1109, %v1451
        %v1453 = vpop.f32.mrb[0].mxu0
        %1454 = vmatprep.mubr.bf16.mxu0 0
        %1455 = vmatmul.mubr.bf16.gmra.mrb[0].mxu0 %v1413
        %v1456 = vpop.f32.mrb[0].mxu0
        %v1457 = vadd.f32 %v1109, %v1456
        %v1458 = vpop.f32.mrb[0].mxu0
        %v1459 = vpop.f32.mrb[0].mxu0
        %v1460 = vadd.f32 %v1109, %v1459
        %v1461 = vpop.f32.mrb[0].mxu0
        %1462 = vdwg.mxu0
        %v1463 = vlaneseq
        %v1464 = vshrl.u32 %v1463, 7
        %v1465 = vsub.s32 2, %v1464
        %v1466 = vrot.slane %v1085, %v1465
        %v1467 = vmul.f32 %v1449, %v1466
        %v1468 = vmul.f32 %v1452, %v1466
        %v1469 = vmul.f32 %v1457, %v1466
        %v1470 = vmul.f32 %v1460, %v1466
        %v1471 = vpack.c.bf16 %v1468, %v1467
        %v1472 = vpack.c.bf16 %v1470, %v1469
        %v1474 = vsel %vm882, %v1471, 0
        %v1477 = vsel %vm882, %v1472, 0
        %1479 = vmatprep.subr.bf16.mxu0 0
        %1480 = vmatpush1.bf16.msra.mxu0 %v1231
        %1481 = vmatprep.subr.bf16.mxu0 0
        %1482 = vmatpush1.bf16.msra.mxu0 0
        %1483 = vmatprep.subr.bf16.mxu0 0
        %1484 = vmatpush1.bf16.msra.mxu0 0
        %1485 = vmatprep.subr.bf16.mxu0 0
        %1486 = vmatpush1.bf16.msra.mxu0 0
        %1487 = vmatprep.subr.bf16.mxu0 0
        %1488 = vmatpush1.bf16.msra.mxu0 0
        %1489 = vmatprep.subr.bf16.mxu0 0
        %1490 = vmatpush1.bf16.msra.mxu0 0
        %1491 = vmatprep.subr.bf16.mxu0 0
        %1492 = vmatpush1.bf16.msra.mxu0 0
        %1493 = vmatprep.subr.bf16.mxu0 0
        %1494 = vmatpush1.bf16.msra.mxu0 0
        %1495 = vmatprep.subr.bf16.mxu0 0
        %1496 = vmatpush1.bf16.msra.mxu0 0
        %1497 = vmatprep.subr.bf16.mxu0 0
        %1498 = vmatpush1.bf16.msra.mxu0 0
        %1499 = vmatprep.subr.bf16.mxu0 0
        %1500 = vmatpush1.bf16.msra.mxu0 0
        %1501 = vmatprep.subr.bf16.mxu0 0
        %1502 = vmatpush1.bf16.msra.mxu0 0
        %1503 = vmatprep.subr.bf16.mxu0 0
        %1504 = vmatpush1.bf16.msra.mxu0 0
        %1505 = vmatprep.subr.bf16.mxu0 0
        %1506 = vmatpush1.bf16.msra.mxu0 0
        %1507 = vmatprep.subr.bf16.mxu0 0
        %1508 = vmatpush1.bf16.msra.mxu0 0
        %1509 = vmatprep.subr.bf16.mxu0 0
        %1510 = vmatpush1.bf16.msra.mxu0 0
        %1511 = vmatprep.mubr.bf16.mxu0 0
        %1512 = vmatmul.mubr.bf16.gmra.mrb[0].mxu0 %v1474
        %v1513 = vpop.f32.mrb[0].mxu0
        %v1514 = vadd.f32 %v1225, %v1513
        %v1515 = vpop.f32.mrb[0].mxu0
        %v1516 = vpop.f32.mrb[0].mxu0
        %v1517 = vadd.f32 %v1225, %v1516
        %v1518 = vpop.f32.mrb[0].mxu0
        %1519 = vmatprep.mubr.bf16.mxu0 0
        %1520 = vmatmul.mubr.bf16.gmra.mrb[0].mxu0 %v1477
        %v1521 = vpop.f32.mrb[0].mxu0
        %v1522 = vadd.f32 %v1225, %v1521
        %v1523 = vpop.f32.mrb[0].mxu0
        %v1524 = vpop.f32.mrb[0].mxu0
        %v1525 = vadd.f32 %v1225, %v1524
        %v1526 = vpop.f32.mrb[0].mxu0
        %1527 = vdwg.mxu0
        %v1528 = vadd.f32 %v1408, %v1514
        %v1529 = vadd.f32 %v1409, %v1517
        %v1530 = vadd.f32 %v1410, %v1522
        %v1531 = vadd.f32 %v1411, %v1525
        %v1532 = vpack.c.bf16 %v1529, %v1528
        %v1533 = vpack.c.bf16 %v1531, %v1530
        %1534 = vmatprep.subr.bf16.mxu0 0
        %1535 = vmatpush1.bf16.msra.mxu0 %v1143
        %1536 = vmatprep.subr.bf16.mxu0 0
        %1537 = vmatpush1.bf16.msra.mxu0 %v1144
        %1538 = vmatprep.subr.bf16.mxu0 0
        %1539 = vmatpush1.bf16.msra.mxu0 %v1145
        %1540 = vmatprep.subr.bf16.mxu0 0
        %1541 = vmatpush1.bf16.msra.mxu0 %v1146
        %1542 = vmatprep.subr.bf16.mxu0 0
        %1543 = vmatpush1.bf16.msra.mxu0 %v1147
        %1544 = vmatprep.subr.bf16.mxu0 0
        %1545 = vmatpush1.bf16.msra.mxu0 %v1148
        %1546 = vmatprep.subr.bf16.mxu0 0
        %1547 = vmatpush1.bf16.msra.mxu0 %v1149
        %1548 = vmatprep.subr.bf16.mxu0 0
        %1549 = vmatpush1.bf16.msra.mxu0 %v1150
        %1550 = vmatprep.subr.bf16.mxu0 0
        %1551 = vmatpush1.bf16.msra.mxu0 0
        %1552 = vmatprep.subr.bf16.mxu0 0
        %1553 = vmatpush1.bf16.msra.mxu0 0
        %1554 = vmatprep.subr.bf16.mxu0 0
        %1555 = vmatpush1.bf16.msra.mxu0 0
        %1556 = vmatprep.subr.bf16.mxu0 0
        %1557 = vmatpush1.bf16.msra.mxu0 0
        %1558 = vmatprep.subr.bf16.mxu0 0
        %1559 = vmatpush1.bf16.msra.mxu0 0
        %1560 = vmatprep.subr.bf16.mxu0 0
        %1561 = vmatpush1.bf16.msra.mxu0 0
        %1562 = vmatprep.subr.bf16.mxu0 0
        %1563 = vmatpush1.bf16.msra.mxu0 0
        %1564 = vmatprep.subr.bf16.mxu0 0
        %1565 = vmatpush1.bf16.msra.mxu0 0
        %1566 = vmatprep.mubr.bf16.mxu0 0
        %1567 = vmatmul.mubr.bf16.gmra.mrb[0].mxu0 %v1532
        %v1568 = vpop.f32.mrb[0].mxu0
        %v1569 = vadd.f32 %v1109, %v1568
        %v1570 = vpop.f32.mrb[0].mxu0
        %v1571 = vpop.f32.mrb[0].mxu0
        %v1572 = vadd.f32 %v1109, %v1571
        %v1573 = vpop.f32.mrb[0].mxu0
        %1574 = vmatprep.mubr.bf16.mxu0 0
        %1575 = vmatmul.mubr.bf16.gmra.mrb[0].mxu0 %v1533
        %v1576 = vpop.f32.mrb[0].mxu0
        %v1577 = vadd.f32 %v1109, %v1576
        %v1578 = vpop.f32.mrb[0].mxu0
        %v1579 = vpop.f32.mrb[0].mxu0
        %v1580 = vadd.f32 %v1109, %v1579
        %v1581 = vpop.f32.mrb[0].mxu0
        %1582 = vdwg.mxu0
        %v1583 = vlaneseq
        %v1584 = vshrl.u32 %v1583, 7
        %v1585 = vsub.s32 3, %v1584
        %v1586 = vrot.slane %v1085, %v1585
        %v1587 = vmul.f32 %v1569, %v1586
        %v1588 = vmul.f32 %v1572, %v1586
        %v1589 = vmul.f32 %v1577, %v1586
        %v1590 = vmul.f32 %v1580, %v1586
        %v1591 = vpack.c.bf16 %v1588, %v1587
        %v1592 = vpack.c.bf16 %v1590, %v1589
        %v1594 = vsel %vm882, %v1591, 0
        %v1597 = vsel %vm882, %v1592, 0
        %1599 = vmatprep.subr.bf16.mxu0 0
        %1600 = vmatpush1.bf16.msra.mxu0 %v1231
        %1601 = vmatprep.subr.bf16.mxu0 0
        %1602 = vmatpush1.bf16.msra.mxu0 0
        %1603 = vmatprep.subr.bf16.mxu0 0
        %1604 = vmatpush1.bf16.msra.mxu0 0
        %1605 = vmatprep.subr.bf16.mxu0 0
        %1606 = vmatpush1.bf16.msra.mxu0 0
        %1607 = vmatprep.subr.bf16.mxu0 0
        %1608 = vmatpush1.bf16.msra.mxu0 0
        %1609 = vmatprep.subr.bf16.mxu0 0
        %1610 = vmatpush1.bf16.msra.mxu0 0
        %1611 = vmatprep.subr.bf16.mxu0 0
        %1612 = vmatpush1.bf16.msra.mxu0 0
        %1613 = vmatprep.subr.bf16.mxu0 0
        %1614 = vmatpush1.bf16.msra.mxu0 0
        %1615 = vmatprep.subr.bf16.mxu0 0
        %1616 = vmatpush1.bf16.msra.mxu0 0
        %1617 = vmatprep.subr.bf16.mxu0 0
        %1618 = vmatpush1.bf16.msra.mxu0 0
        %1619 = vmatprep.subr.bf16.mxu0 0
        %1620 = vmatpush1.bf16.msra.mxu0 0
        %1621 = vmatprep.subr.bf16.mxu0 0
        %1622 = vmatpush1.bf16.msra.mxu0 0
        %1623 = vmatprep.subr.bf16.mxu0 0
        %1624 = vmatpush1.bf16.msra.mxu0 0
        %1625 = vmatprep.subr.bf16.mxu0 0
        %1626 = vmatpush1.bf16.msra.mxu0 0
        %1627 = vmatprep.subr.bf16.mxu0 0
        %1628 = vmatpush1.bf16.msra.mxu0 0
        %1629 = vmatprep.subr.bf16.mxu0 0
        %1630 = vmatpush1.bf16.msra.mxu0 0
        %1631 = vmatprep.mubr.bf16.mxu0 0
        %1632 = vmatmul.mubr.bf16.gmra.mrb[0].mxu0 %v1594
        %v1633 = vpop.f32.mrb[0].mxu0
        %v1634 = vadd.f32 %v1225, %v1633
        %v1635 = vpop.f32.mrb[0].mxu0
        %v1636 = vpop.f32.mrb[0].mxu0
        %v1637 = vadd.f32 %v1225, %v1636
        %v1638 = vpop.f32.mrb[0].mxu0
        %1639 = vmatprep.mubr.bf16.mxu0 0
        %1640 = vmatmul.mubr.bf16.gmra.mrb[0].mxu0 %v1597
        %v1641 = vpop.f32.mrb[0].mxu0
        %v1642 = vadd.f32 %v1225, %v1641
        %v1643 = vpop.f32.mrb[0].mxu0
        %v1644 = vpop.f32.mrb[0].mxu0
        %v1645 = vadd.f32 %v1225, %v1644
        %v1646 = vpop.f32.mrb[0].mxu0
        %1647 = vdwg.mxu0
        %v1648 = vadd.f32 %v1528, %v1634
        %v1649 = vadd.f32 %v1529, %v1637
        %v1650 = vadd.f32 %v1530, %v1642
        %v1651 = vadd.f32 %v1531, %v1645
        %v1652 = vpack.c.bf16 %v1649, %v1648
        %v1653 = vpack.c.bf16 %v1651, %v1650
        %v1654 = vld [vmem:[%s8] sm:$0xf]
        %v1655 = vld [vmem:[%s8 + $0x4] sm:$0xf]
        %v1656 = vld [vmem:[%s8 + $0x8] sm:$0xf]
        %v1657 = vld [vmem:[%s8 + $0xc] sm:$0xf]
        %v1658 = vld [vmem:[%s8 + $0x10] sm:$0xf]
        %v1659 = vld [vmem:[%s8 + $0x14] sm:$0xf]
        %v1660 = vld [vmem:[%s8 + $0x18] sm:$0xf]
        %v1661 = vld [vmem:[%s8 + $0x1c] sm:$0xf]
        %v1662 = vld [vmem:[%s8 + $0x20] sm:$0xf]
        %v1663 = vld [vmem:[%s8 + $0x24] sm:$0xf]
        %v1664 = vld [vmem:[%s8 + $0x28] sm:$0xf]
        %v1665 = vld [vmem:[%s8 + $0x2c] sm:$0xf]
        %v1666 = vld [vmem:[%s8 + $0x30] sm:$0xf]
        %v1667 = vld [vmem:[%s8 + $0x34] sm:$0xf]
        %v1668 = vld [vmem:[%s8 + $0x38] sm:$0xf]
        %v1669 = vld [vmem:[%s8 + $0x3c] sm:$0xf]
        %v1670 = vld [vmem:[%s9] sm:$0x1]
        %v1672 = vlaneseq
        %v1673 = vshrl.u32 %v1672, 7
        %v1674 = vsub.s32 0, %v1673
        %v1675 = vrot.slane %v1670, %v1674
        %v1693 = vunpack.c.l.b16 %v1654
        %v1694 = vunpack.c.l.b16 %v1655
        %v1695 = vunpack.c.l.b16 %v1656
        %v1696 = vunpack.c.l.b16 %v1657
        %v1697 = vunpack.c.l.b16 %v1658
        %v1698 = vunpack.c.l.b16 %v1659
        %v1699 = vunpack.c.l.b16 %v1660
        %v1700 = vunpack.c.l.b16 %v1661
        %v1701 = vunpack.c.l.b16 %v1662
        %v1702 = vunpack.c.l.b16 %v1663
        %v1703 = vunpack.c.l.b16 %v1664
        %v1704 = vunpack.c.l.b16 %v1665
        %v1705 = vunpack.c.l.b16 %v1666
        %v1706 = vunpack.c.l.b16 %v1667
        %v1707 = vunpack.c.l.b16 %v1668
        %v1708 = vunpack.c.l.b16 %v1669
        %v1709 = vpack.c.b16 %v1694, %v1693
        %v1710 = vpack.c.b16 %v1696, %v1695
        %v1711 = vpack.c.b16 %v1698, %v1697
        %v1712 = vpack.c.b16 %v1700, %v1699
        %v1713 = vpack.c.b16 %v1702, %v1701
        %v1714 = vpack.c.b16 %v1704, %v1703
        %v1715 = vpack.c.b16 %v1706, %v1705
        %v1716 = vpack.c.b16 %v1708, %v1707
        %1725 = vmatprep.subr.bf16.mxu0 0
        %1726 = vmatpush1.bf16.msra.mxu0 %v1709
        %1727 = vmatprep.subr.bf16.mxu0 0
        %1728 = vmatpush1.bf16.msra.mxu0 %v1710
        %1729 = vmatprep.subr.bf16.mxu0 0
        %1730 = vmatpush1.bf16.msra.mxu0 %v1711
        %1731 = vmatprep.subr.bf16.mxu0 0
        %1732 = vmatpush1.bf16.msra.mxu0 %v1712
        %1733 = vmatprep.subr.bf16.mxu0 0
        %1734 = vmatpush1.bf16.msra.mxu0 %v1713
        %1735 = vmatprep.subr.bf16.mxu0 0
        %1736 = vmatpush1.bf16.msra.mxu0 %v1714
        %1737 = vmatprep.subr.bf16.mxu0 0
        %1738 = vmatpush1.bf16.msra.mxu0 %v1715
        %1739 = vmatprep.subr.bf16.mxu0 0
        %1740 = vmatpush1.bf16.msra.mxu0 %v1716
        %1741 = vmatprep.subr.bf16.mxu0 0
        %1742 = vmatpush1.bf16.msra.mxu0 0
        %1743 = vmatprep.subr.bf16.mxu0 0
        %1744 = vmatpush1.bf16.msra.mxu0 0
        %1745 = vmatprep.subr.bf16.mxu0 0
        %1746 = vmatpush1.bf16.msra.mxu0 0
        %1747 = vmatprep.subr.bf16.mxu0 0
        %1748 = vmatpush1.bf16.msra.mxu0 0
        %1749 = vmatprep.subr.bf16.mxu0 0
        %1750 = vmatpush1.bf16.msra.mxu0 0
        %1751 = vmatprep.subr.bf16.mxu0 0
        %1752 = vmatpush1.bf16.msra.mxu0 0
        %1753 = vmatprep.subr.bf16.mxu0 0
        %1754 = vmatpush1.bf16.msra.mxu0 0
        %1755 = vmatprep.subr.bf16.mxu0 0
        %1756 = vmatpush1.bf16.msra.mxu0 0
        %1757 = vmatprep.mubr.bf16.mxu0 0
        %1758 = vmatmul.mubr.bf16.gmra.mrb[0].mxu0 %v1652
        %v1759 = vpop.f32.mrb[0].mxu0
        %v1760 = vadd.f32 %v1675, %v1759
        %v1761 = vpop.f32.mrb[0].mxu0
        %v1762 = vpop.f32.mrb[0].mxu0
        %v1763 = vadd.f32 %v1675, %v1762
        %v1764 = vpop.f32.mrb[0].mxu0
        %1765 = vmatprep.mubr.bf16.mxu0 0
        %1766 = vmatmul.mubr.bf16.gmra.mrb[0].mxu0 %v1653
        %v1767 = vpop.f32.mrb[0].mxu0
        %v1768 = vadd.f32 %v1675, %v1767
        %v1769 = vpop.f32.mrb[0].mxu0
        %v1770 = vpop.f32.mrb[0].mxu0
        %v1771 = vadd.f32 %v1675, %v1770
        %v1772 = vpop.f32.mrb[0].mxu0
        %1773 = vdwg.mxu0
        %1774 = vmax.xlane.f32.xlu0 %v1760
        %v1775 = vpop.xlane.xlu0 %1774
        %1776 = vmax.xlane.f32.xlu0 %v1763
        %v1777 = vpop.xlane.xlu0 %1776
        %1778 = vmax.xlane.f32.xlu0 %v1768
        %v1779 = vpop.xlane.xlu0 %1778
        %1780 = vmax.xlane.f32.xlu0 %v1771
        %v1781 = vpop.xlane.xlu0 %1780
        %v1782 = vsub.f32 %v1760, %v1775
        %v1783 = vsub.f32 %v1763, %v1777
        %v1784 = vsub.f32 %v1768, %v1779
        %v1785 = vsub.f32 %v1771, %v1781
        %v1786 = vmul.f32 %v1782, 1.442695
        %v1787 = vpow.pop %v1786
        %v1788 = vmul.f32 %v1783, 1.442695
        %v1789 = vpow.pop %v1788
        %v1790 = vmul.f32 %v1784, 1.442695
        %v1791 = vpow.pop %v1790
        %v1792 = vmul.f32 %v1785, 1.442695
        %v1793 = vpow.pop %v1792
        %1794 = vadd.xlane.f32.xlu0 %v1787
        %v1795 = vpop.xlane.xlu0 %1794
        %1796 = vadd.xlane.f32.xlu0 %v1789
        %v1797 = vpop.xlane.xlu0 %1796
        %1798 = vadd.xlane.f32.xlu0 %v1791
        %v1799 = vpop.xlane.xlu0 %1798
        %1800 = vadd.xlane.f32.xlu0 %v1793
        %v1801 = vpop.xlane.xlu0 %1800
        %v1802 = vlog2.pop %v1795
        %v1803 = vmul.f32 %v1802, 0.6931472
        %v1804 = vlog2.pop %v1797
        %v1805 = vmul.f32 %v1804, 0.6931472
        %v1806 = vlog2.pop %v1799
        %v1807 = vmul.f32 %v1806, 0.6931472
        %v1808 = vlog2.pop %v1801
        %v1809 = vmul.f32 %v1808, 0.6931472
        %v1810 = vsub.f32 %v1782, %v1803
        %v1811 = vsub.f32 %v1783, %v1805
        %v1812 = vsub.f32 %v1784, %v1807
        %v1813 = vsub.f32 %v1785, %v1809
        %1814 = vst [vmem:[%s393] sm:$0xff] %v1810
        %1815 = vst [vmem:[%s393 + $0x8] sm:$0xff] %v1811
        %1816 = vst [vmem:[%s393 + $0x10] sm:$0xff] %v1812
        %1817 = vst [vmem:[%s393 + $0x18] sm:$0xff] %v1813
        %s1818 = sand.u32 %s251, 1
        %s1819 = scalar_lea.sflag [#allocation4], %s1818
        %s1820 = sand.u32 %s251, 1
        %s1821 = smul.addr %s1820, 32
        %s1822 = scalar_lea.vmem [#allocation7], %s1821
        // Predicated region
        $region69: #{tpu_custom_call.1} parent=59 // pred_check
          %p1823 = pneg %p261
        $region70: #{tpu_custom_call.1} parent=59 // pred_check_branch
          %1825 = sbr.rel (%p1823) target = $region72
        $region71: #{tpu_custom_call.1} parent=59 // pred_region
          %s1826 = smul.u32 4, %s28
          %s1828 = ssub.s32 512, 512
          %1829 = vsyncadd %s1819, %s1828
          %s1830 = smul.addr %s1826, 128
          %s1831 = scalar_lea.hbm %s10, %s1830
          %s1832 = sshll.u32 %s1822, 4
          %s1833 = int_to_ptr.vmem [resolvable:$true] %s1832
          %1838 = dma.vmem_to_hbm [thread:$0]  %s1833, 512, %s1831, %s1819, 128, 128, 8
        $region72: #{tpu_custom_call.1} parent=59 // pred_fallthru
          _
      $region60: #{tpu_custom_call.1} parent=5 // pred_fallthru
        _
      %p1839 = scmp.le.s32.totalorder 2, %s23
      // Predicated region
      $region73: #{tpu_custom_call.1} parent=5 // pred_check
        %p1840 = pneg %p1839
      $region74: #{tpu_custom_call.1} parent=5 // pred_check_branch
        %1842 = sbr.rel (%p1840) target = $region76
      $region75: #{tpu_custom_call.1} parent=5 // pred_region
        %s1843 = ssub.s32 %s23, 2
        // Predicated region
        $region77: #{tpu_custom_call.1} parent=75 // pred_check
          %p1844 = pneg %p267
        $region78: #{tpu_custom_call.1} parent=75 // pred_check_branch
          %1846 = sbr.rel (%p1844) target = $region80
        $region79: #{tpu_custom_call.1} parent=75 // pred_region
          %s1847 = sand.u32 %s252, 1
          %s1848 = scalar_lea.sflag [#allocation4], %s1847
          %s1849 = sand.u32 %s252, 1
          %s1850 = smul.addr %s1849, 32
          %s1851 = scalar_lea.vmem [#allocation7], %s1850
          %1852 = dma.done %s1848, 512
        $region80: #{tpu_custom_call.1} parent=75 // pred_fallthru
          _
      $region76: #{tpu_custom_call.1} parent=5 // pred_fallthru
        _
    $region6: #{tpu_custom_call.1} parent=1 // loop_footer
      %s27 = sadd.s32 1, %s23
    $region7: #{tpu_custom_call.1} parent=1 // loop_footer_branch
      %22 = sbr.rel target = $region3
    $region8: #{tpu_custom_call.1} parent=1 // loop_exit
      _
    %1853 = vsyncpa [#allocation3], 1
    %s1854 = scalar_lea.sflag [#allocation3], 1
    %1855 = vsyncpa %s1854, 1
    %1856 = vsyncpa [#allocation6], 1
    %1857 = vsyncpa [#allocation4], 1
    %s1858 = scalar_lea.sflag [#allocation4], 1
    %1859 = vsyncpa %s1858, 1

</llo_original>
